<compile_context>
chip_gen: v6e
topology: v6e:2x2x1
jax: 0.10.0
libtpu: 0.0.40
codegen_flags: <defaults>
</compile_context>

<pallas_src>
import math

import jax
import jax.numpy as jnp
from jax.experimental import pallas as pl
from jax.experimental.pallas import tpu as pltpu

# ---------------- config (small synthetic shapes) ----------------
B, S, H = 2, 8, 32          # batch, seq, hidden
NH = 2                      # attention heads
HD = H // NH                # head dim
NLAYER = 2                  # transformer layers
VOCAB = 50
PAD_ID = 0                  # config_pad_token_id
NTASK = 2                   # number of classifier heads (model_list length)
NLABEL = 3                  # num_labels per head
TL = NTASK * NLABEL
EPS = 1e-5
NEG = -1e9

# bf16 operands for the MXU (v6e/v7x native); f32 accumulation everywhere.
# Switch to jnp.float32 for bit-exact f32 reference behaviour.
MXU_DTYPE = jnp.bfloat16


def _gelu_new(x):
    # GPT-2 "gelu_new" (tanh approximation)
    return 0.5 * x * (1.0 + jnp.tanh(0.7978845608028654 * (x + 0.044715 * x * x * x)))


# ---------------- fused Pallas kernel ----------------
def fused_gpt2_kernel(seqlen_ref,                      # scalar-prefetch (SMEM) [B]
                      x_ref, mask_ref,                 # embeddings, additive mask
                      ln1g_ref, ln1b_ref, wqkv_ref, bqkv_ref, wproj_ref, bproj_ref,
                      ln2g_ref, ln2b_ref, wfc_ref, bfc_ref, wout_ref, bout_ref,
                      lnfg_ref, lnfb_ref, scorew_ref,  # final LN + stacked score weights
                      out_ref,                         # pooled logits [1, 1, T*L]
                      h_scratch):                      # resident hidden state [S, H]
    b = pl.program_id(0)
    layer = pl.program_id(1)

    # Load embeddings into the resident hidden-state scratch on the first layer.
    @pl.when(layer == 0)
    def _():
        h_scratch[...] = x_ref[0]

    x = h_scratch[...]                                 # [S, H] f32

    # --- LayerNorm 1 ---
    mu = jnp.mean(x, axis=-1, keepdims=True)
    var = jnp.mean((x - mu) ** 2, axis=-1, keepdims=True)
    h1 = (x - mu) * jax.lax.rsqrt(var + EPS) * ln1g_ref[0] + ln1b_ref[0]

    # --- QKV projection (Conv1D: x @ W + b) ---
    qkv = jnp.dot(h1.astype(MXU_DTYPE), wqkv_ref[0],
                  preferred_element_type=jnp.float32) + bqkv_ref[0]   # [S, 3H] f32

    # --- attention bias: causal + padding, computed once per (b, layer) ---
    row = jax.lax.broadcasted_iota(jnp.int32, (S, S), 0)
    col = jax.lax.broadcasted_iota(jnp.int32, (S, S), 1)
    bias = jnp.where(col <= row, 0.0, NEG).astype(jnp.float32) + mask_ref[0]  # [S,S]

    scale = 1.0 / math.sqrt(HD)
    heads = []
    for hh in range(NH):                               # static unrolled (NH small)
        q = qkv[:, hh * HD:(hh + 1) * HD]
        k = qkv[:, H + hh * HD: H + (hh + 1) * HD]
        v = qkv[:, 2 * H + hh * HD: 2 * H + (hh + 1) * HD]
        s = jax.lax.dot_general(q.astype(MXU_DTYPE), k.astype(MXU_DTYPE),
                                (((1,), (1,)), ((), ())),
                                preferred_element_type=jnp.float32) * scale + bias
        s = s - jnp.max(s, axis=-1, keepdims=True)
        p = jnp.exp(s)
        p = p * pl.reciprocal(jnp.sum(p, axis=-1, keepdims=True), approx=True)
        heads.append(jnp.dot(p.astype(MXU_DTYPE), v.astype(MXU_DTYPE),
                             preferred_element_type=jnp.float32))
    attn = jnp.concatenate(heads, axis=-1)             # [S, H] f32 (kept in vregs)

    proj = jnp.dot(attn.astype(MXU_DTYPE), wproj_ref[0],
                   preferred_element_type=jnp.float32) + bproj_ref[0]
    x2 = x + proj

    # --- LayerNorm 2 + MLP ---
    mu2 = jnp.mean(x2, axis=-1, keepdims=True)
    var2 = jnp.mean((x2 - mu2) ** 2, axis=-1, keepdims=True)
    h2 = (x2 - mu2) * jax.lax.rsqrt(var2 + EPS) * ln2g_ref[0] + ln2b_ref[0]
    fc = _gelu_new(jnp.dot(h2.astype(MXU_DTYPE), wfc_ref[0],
                           preferred_element_type=jnp.float32) + bfc_ref[0])
    mlp = jnp.dot(fc.astype(MXU_DTYPE), wout_ref[0],
                  preferred_element_type=jnp.float32) + bout_ref[0]

    h_new = x2 + mlp
    h_scratch[...] = h_new                             # hidden stays in VMEM

    # --- epilogue on the last layer: pool token, final LN, all score heads ---
    @pl.when(layer == NLAYER - 1)
    def _():
        idx = seqlen_ref[b]
        sel = (jax.lax.broadcasted_iota(jnp.int32, (S, 1), 0) == idx).astype(jnp.float32)
        pooled = jnp.sum(h_new * sel, axis=0, keepdims=True)          # [1, H]
        mu_f = jnp.mean(pooled, axis=-1, keepdims=True)
        var_f = jnp.mean((pooled - mu_f) ** 2, axis=-1, keepdims=True)
        pooled_ln = (pooled - mu_f) * jax.lax.rsqrt(var_f + EPS) * lnfg_ref[...] + lnfb_ref[...]
        out_ref[0] = jnp.dot(pooled_ln.astype(MXU_DTYPE), scorew_ref[...],
                             preferred_element_type=jnp.float32)      # [1, T*L]


# ---------------- pallas_call wrapper ----------------
def _layer_spec(shape):
    n = len(shape)
    return pl.BlockSpec((1,) + shape, lambda b, l, sl, _n=n: (l,) + (0,) * _n)


def _const_spec(shape):
    n = len(shape)
    return pl.BlockSpec(shape, lambda b, l, sl, _n=n: (0,) * _n)


def fused_forward(sequence_lengths, h_emb, attn_add, p):
    grid_spec = pltpu.PrefetchScalarGridSpec(
        num_scalar_prefetch=1,                 # sequence_lengths -> SMEM
        grid=(B, NLAYER),
        in_specs=[
            pl.BlockSpec((1, S, H), lambda b, l, sl: (b, 0, 0)),   # embeddings
            pl.BlockSpec((1, 1, S), lambda b, l, sl: (b, 0, 0)),   # additive padding mask
            _layer_spec((1, H)), _layer_spec((1, H)),              # ln1 gamma/beta
            _layer_spec((H, 3 * H)), _layer_spec((1, 3 * H)),      # c_attn
            _layer_spec((H, H)), _layer_spec((1, H)),              # attn c_proj
            _layer_spec((1, H)), _layer_spec((1, H)),              # ln2 gamma/beta
            _layer_spec((H, 4 * H)), _layer_spec((1, 4 * H)),      # c_fc
            _layer_spec((4 * H, H)), _layer_spec((1, H)),          # mlp c_proj
            _const_spec((1, H)), _const_spec((1, H)),              # ln_f gamma/beta
            _const_spec((H, TL)),                                  # stacked score weights
        ],
        out_specs=pl.BlockSpec((1, 1, TL), lambda b, l, sl: (b, 0, 0)),
        scratch_shapes=[pltpu.VMEM((S, H), jnp.float32)],
    )
    return pl.pallas_call(
        fused_gpt2_kernel,
        out_shape=jax.ShapeDtypeStruct((B, 1, TL), jnp.float32),
        grid_spec=grid_spec,
        compiler_params=pltpu.CompilerParams(
            dimension_semantics=("parallel", "arbitrary")),
    )(sequence_lengths, h_emb, attn_add,
      p['ln1_g'], p['ln1_b'], p['w_qkv'], p['b_qkv'], p['w_proj'], p['b_proj'],
      p['ln2_g'], p['ln2_b'], p['w_fc'], p['b_fc'], p['w_out'], p['b_out'],
      p['lnf_g'], p['lnf_b'], p['score_wt'])


# ---------------- parameters (deterministic synthetic init) ----------------
def init_params(key):
    keys = jax.random.split(key, 3 + NLAYER)
    p = {
        'wte': 0.02 * jax.random.normal(keys[0], (VOCAB, H), jnp.float32),
        'wpe': 0.02 * jax.random.normal(keys[1], (S, H), jnp.float32),
        'lnf_g': jnp.ones((1, H), jnp.float32),
        'lnf_b': jnp.zeros((1, H), jnp.float32),
        # layer-stacked norm params / biases (f32)
        'ln1_g': jnp.ones((NLAYER, 1, H), jnp.float32),
        'ln1_b': jnp.zeros((NLAYER, 1, H), jnp.float32),
        'ln2_g': jnp.ones((NLAYER, 1, H), jnp.float32),
        'ln2_b': jnp.zeros((NLAYER, 1, H), jnp.float32),
        'b_qkv': jnp.zeros((NLAYER, 1, 3 * H), jnp.float32),
        'b_proj': jnp.zeros((NLAYER, 1, H), jnp.float32),
        'b_fc': jnp.zeros((NLAYER, 1, 4 * H), jnp.float32),
        'b_out': jnp.zeros((NLAYER, 1, H), jnp.float32),
    }
    w_qkv, w_proj, w_fc, w_out = [], [], [], []
    for l in range(NLAYER):
        bk = jax.random.split(keys[2 + l], 4)
        w_qkv.append(0.02 * jax.random.normal(bk[0], (H, 3 * H), jnp.float32))
        w_proj.append(0.02 * jax.random.normal(bk[1], (H, H), jnp.float32))
        w_fc.append(0.02 * jax.random.normal(bk[2], (H, 4 * H), jnp.float32))
        w_out.append(0.02 * jax.random.normal(bk[3], (4 * H, H), jnp.float32))
    # big matmul weights stored in MXU dtype (halves weight DMA bytes for bf16)
    p['w_qkv'] = jnp.stack(w_qkv).astype(MXU_DTYPE)     # [NLAYER, H, 3H]
    p['w_proj'] = jnp.stack(w_proj).astype(MXU_DTYPE)   # [NLAYER, H, H]
    p['w_fc'] = jnp.stack(w_fc).astype(MXU_DTYPE)       # [NLAYER, H, 4H]
    p['w_out'] = jnp.stack(w_out).astype(MXU_DTYPE)     # [NLAYER, 4H, H]
    # per-task score layers: nn.Linear(H, NLABEL, bias=False), weight [NLABEL, H]
    score_w = 0.02 * jax.random.normal(keys[2 + NLAYER], (NTASK, NLABEL, H), jnp.float32)
    p['score_wt'] = score_w.reshape(NTASK * NLABEL, H).T.astype(MXU_DTYPE)   # [H, T*L]
    return p


# ---------------- forward (mirrors gpt2_merged_model.forward, single_task=False) ----------------
def gpt2_merged_forward(params, input_ids, attention_mask):
    batch_size, seq_len = input_ids.shape[:2]

    # sequence_lengths = (argmax(input_ids == pad) - 1) % seq_len   (glue)
    eq = (input_ids == PAD_ID).astype(jnp.int32)
    sequence_lengths = ((jnp.argmax(eq, axis=-1) - 1) % seq_len).astype(jnp.int32)

    # embeddings (gather, glue)
    # TODO(synk): could be folded into the fused kernel via per-row DMA gather.
    pos = jnp.arange(seq_len)
    h = params['wte'][input_ids] + params['wpe'][pos][None, :, :]

    # additive padding mask for attention
    attn_add = ((1.0 - attention_mask.astype(jnp.float32)) * NEG).reshape(
        batch_size, 1, seq_len)

    # one fused kernel: all transformer layers + final LN + pooled classifier
    pooled_all = fused_forward(sequence_lengths, h, attn_add, params)[:, 0, :]  # [B, T*L]
    outputs = [pooled_all[:, t * NLABEL:(t + 1) * NLABEL] for t in range(NTASK)]
    return outputs


if __name__ == "__main__":
    key = jax.random.PRNGKey(0)
    pkey, ikey = jax.random.split(key)
    params = init_params(pkey)

    input_ids = jax.random.randint(ikey, (B, S), 1, VOCAB, dtype=jnp.int32)
    input_ids = input_ids.at[0, 6:].set(PAD_ID)            # batch 0 has padding
    attention_mask = (input_ids != PAD_ID).astype(jnp.int32)

    fwd = jax.jit(gpt2_merged_forward)
    outputs = fwd(params, input_ids, attention_mask)
    outputs = [jax.block_until_ready(o) for o in outputs]
    assert len(outputs) == NTASK and all(o.shape == (B, NLABEL) for o in outputs)
    print("KERNEL_OK")
</pallas_src>

<mosaic_0001>
module attributes {stable_mosaic.version = 11 : i64} {
  func.func @fused_gpt2_kernel(%arg0: i32, %arg1: i32, %arg2: memref<2xi32, #tpu.memory_space<smem>>, %arg3: memref<1x8x32xf32, #tpu.memory_space<vmem>>, %arg4: memref<1x1x8xf32, #tpu.memory_space<vmem>>, %arg5: memref<1x1x32xf32, #tpu.memory_space<vmem>>, %arg6: memref<1x1x32xf32, #tpu.memory_space<vmem>>, %arg7: memref<1x32x96xbf16, #tpu.memory_space<vmem>>, %arg8: memref<1x1x96xf32, #tpu.memory_space<vmem>>, %arg9: memref<1x32x32xbf16, #tpu.memory_space<vmem>>, %arg10: memref<1x1x32xf32, #tpu.memory_space<vmem>>, %arg11: memref<1x1x32xf32, #tpu.memory_space<vmem>>, %arg12: memref<1x1x32xf32, #tpu.memory_space<vmem>>, %arg13: memref<1x32x128xbf16, #tpu.memory_space<vmem>>, %arg14: memref<1x1x128xf32, #tpu.memory_space<vmem>>, %arg15: memref<1x128x32xbf16, #tpu.memory_space<vmem>>, %arg16: memref<1x1x32xf32, #tpu.memory_space<vmem>>, %arg17: memref<1x32xf32, #tpu.memory_space<vmem>>, %arg18: memref<1x32xf32, #tpu.memory_space<vmem>>, %arg19: memref<32x6xbf16, #tpu.memory_space<vmem>>, %arg20: memref<1x1x6xf32, #tpu.memory_space<vmem>>, %arg21: memref<8x32xf32, #tpu.memory_space<vmem>>) attributes {dimension_semantics = [#tpu.dimension_semantics<parallel>, #tpu.dimension_semantics<arbitrary>], iteration_bounds = array<i64: 2, 2>, scalar_prefetch = 1 : i64, scratch_operands = 1 : i64, tpu.core_type = #tpu.core_type<tc>, window_params = [{transform_indices = @transform_0, window_bounds = array<i64: 1, 8, 32>}, {transform_indices = @transform_1, window_bounds = array<i64: 1, 1, 8>}, {transform_indices = @transform_2, window_bounds = array<i64: 1, 1, 32>}, {transform_indices = @transform_3, window_bounds = array<i64: 1, 1, 32>}, {transform_indices = @transform_4, window_bounds = array<i64: 1, 32, 96>}, {transform_indices = @transform_5, window_bounds = array<i64: 1, 1, 96>}, {transform_indices = @transform_6, window_bounds = array<i64: 1, 32, 32>}, {transform_indices = @transform_7, window_bounds = array<i64: 1, 1, 32>}, {transform_indices = @transform_8, window_bounds = array<i64: 1, 1, 32>}, {transform_indices = @transform_9, window_bounds = array<i64: 1, 1, 32>}, {transform_indices = @transform_10, window_bounds = array<i64: 1, 32, 128>}, {transform_indices = @transform_11, window_bounds = array<i64: 1, 1, 128>}, {transform_indices = @transform_12, window_bounds = array<i64: 1, 128, 32>}, {transform_indices = @transform_13, window_bounds = array<i64: 1, 1, 32>}, {pipeline_mode = #tpu.pipeline_mode<synchronous>, transform_indices = @transform_14, window_bounds = array<i64: 1, 32>}, {pipeline_mode = #tpu.pipeline_mode<synchronous>, transform_indices = @transform_15, window_bounds = array<i64: 1, 32>}, {pipeline_mode = #tpu.pipeline_mode<synchronous>, transform_indices = @transform_16, window_bounds = array<i64: 32, 6>}, {transform_indices = @transform_17, window_bounds = array<i64: 1, 1, 6>}]} {
    %c0_i32 = arith.constant 0 : i32
    %0 = arith.cmpi eq, %arg1, %c0_i32 : i32
    %1 = arith.extui %0 : i1 to i32
    %c0_i32_0 = arith.constant 0 : i32
    %2 = arith.cmpi ne, %1, %c0_i32_0 : i32
    scf.if %2 {
      %c0_73 = arith.constant 0 : index
      %c0_74 = arith.constant 0 : index
      %c0_75 = arith.constant 0 : index
      %162 = vector.load %arg3[%c0_73, %c0_74, %c0_75] : memref<1x8x32xf32, #tpu.memory_space<vmem>>, vector<1x8x32xf32>
      %163 = vector.shape_cast %162 : vector<1x8x32xf32> to vector<8x32xf32>
      %c0_76 = arith.constant 0 : index
      %c0_77 = arith.constant 0 : index
      %164 = vector.load %arg21[%c0_76, %c0_77] : memref<8x32xf32, #tpu.memory_space<vmem>>, vector<8x32xf32>
      tpu.vector_store %arg21[%c0_76, %c0_77], %163 {strides = array<i32>} : memref<8x32xf32, #tpu.memory_space<vmem>>, vector<8x32xf32>,
    } else {
    }
    %c0 = arith.constant 0 : index
    %c0_1 = arith.constant 0 : index
    %3 = vector.load %arg21[%c0, %c0_1] : memref<8x32xf32, #tpu.memory_space<vmem>>, vector<8x32xf32>
    %cst = arith.constant dense<0.000000e+00> : vector<8xf32>
    %4 = vector.multi_reduction <add>, %3, %cst [1] : vector<8x32xf32> to vector<8xf32>
    %5 = vector.shape_cast %4 : vector<8xf32> to vector<8x1xf32>
    %cst_2 = arith.constant 3.200000e+01 : f32
    %6 = vector.broadcast %cst_2 : f32 to vector<8x1xf32>
    %7 = arith.divf %5, %6 : vector<8x1xf32>
    %8 = vector.broadcast %7 : vector<8x1xf32> to vector<8x32xf32>
    %9 = arith.subf %3, %8 : vector<8x32xf32>
    %10 = arith.mulf %9, %9 : vector<8x32xf32>
    %cst_3 = arith.constant dense<0.000000e+00> : vector<8xf32>
    %11 = vector.multi_reduction <add>, %10, %cst_3 [1] : vector<8x32xf32> to vector<8xf32>
    %12 = vector.shape_cast %11 : vector<8xf32> to vector<8x1xf32>
    %cst_4 = arith.constant 3.200000e+01 : f32
    %13 = vector.broadcast %cst_4 : f32 to vector<8x1xf32>
    %14 = arith.divf %12, %13 : vector<8x1xf32>
    %15 = vector.broadcast %7 : vector<8x1xf32> to vector<8x32xf32>
    %16 = arith.subf %3, %15 : vector<8x32xf32>
    %cst_5 = arith.constant 9.99999974E-6 : f32
    %17 = vector.broadcast %cst_5 : f32 to vector<8x1xf32>
    %18 = arith.addf %14, %17 : vector<8x1xf32>
    %19 = math.rsqrt %18 : vector<8x1xf32>
    %20 = vector.broadcast %19 : vector<8x1xf32> to vector<8x32xf32>
    %21 = arith.mulf %16, %20 : vector<8x32xf32>
    %c0_6 = arith.constant 0 : index
    %c0_7 = arith.constant 0 : index
    %c0_8 = arith.constant 0 : index
    %22 = vector.load %arg5[%c0_6, %c0_7, %c0_8] : memref<1x1x32xf32, #tpu.memory_space<vmem>>, vector<1x1x32xf32>
    %23 = vector.shape_cast %22 : vector<1x1x32xf32> to vector<1x32xf32>
    %24 = vector.broadcast %23 : vector<1x32xf32> to vector<8x32xf32>
    %25 = arith.mulf %21, %24 : vector<8x32xf32>
    %c0_9 = arith.constant 0 : index
    %c0_10 = arith.constant 0 : index
    %c0_11 = arith.constant 0 : index
    %26 = vector.load %arg6[%c0_9, %c0_10, %c0_11] : memref<1x1x32xf32, #tpu.memory_space<vmem>>, vector<1x1x32xf32>
    %27 = vector.shape_cast %26 : vector<1x1x32xf32> to vector<1x32xf32>
    %28 = vector.broadcast %27 : vector<1x32xf32> to vector<8x32xf32>
    %29 = arith.addf %25, %28 : vector<8x32xf32>
    %30 = arith.truncf %29 : vector<8x32xf32> to vector<8x32xbf16>
    %c0_12 = arith.constant 0 : index
    %c0_13 = arith.constant 0 : index
    %c0_14 = arith.constant 0 : index
    %31 = vector.load %arg7[%c0_12, %c0_13, %c0_14] : memref<1x32x96xbf16, #tpu.memory_space<vmem>>, vector<1x32x96xbf16>
    %32 = vector.shape_cast %31 : vector<1x32x96xbf16> to vector<32x96xbf16>
    %cst_15 = arith.constant dense<0.000000e+00> : vector<8x96xf32>
    %33 = tpu.matmul %30, %32, %cst_15 {dimension_numbers = #tpu.dot_dimension_numbers<[1], [0], [0], [1], [0, 0, 1, 1], [], []>} : vector<8x32xbf16>, vector<32x96xbf16>, vector<8x96xf32> -> vector<8x96xf32>
    %c0_16 = arith.constant 0 : index
    %c0_17 = arith.constant 0 : index
    %c0_18 = arith.constant 0 : index
    %34 = vector.load %arg8[%c0_16, %c0_17, %c0_18] : memref<1x1x96xf32, #tpu.memory_space<vmem>>, vector<1x1x96xf32>
    %35 = vector.shape_cast %34 : vector<1x1x96xf32> to vector<1x96xf32>
    %36 = vector.broadcast %35 : vector<1x96xf32> to vector<8x96xf32>
    %37 = arith.addf %33, %36 : vector<8x96xf32>
    %38 = tpu.iota {dimensions = array<i32: 0>} : vector<8x8xi32>
    %39 = tpu.iota {dimensions = array<i32: 1>} : vector<8x8xi32>
    %40 = arith.cmpi sle, %39, %38 : vector<8x8xi32>
    %cst_19 = arith.constant 0.000000e+00 : f32
    %cst_20 = arith.constant -1.000000e+09 : f32
    %41 = vector.broadcast %cst_19 : f32 to vector<8x8xf32>
    %42 = vector.broadcast %cst_20 : f32 to vector<8x8xf32>
    %43 = arith.select %40, %41, %42 : vector<8x8xi1>, vector<8x8xf32>
    %c0_21 = arith.constant 0 : index
    %c0_22 = arith.constant 0 : index
    %c0_23 = arith.constant 0 : index
    %44 = vector.load %arg4[%c0_21, %c0_22, %c0_23] : memref<1x1x8xf32, #tpu.memory_space<vmem>>, vector<1x1x8xf32>
    %45 = vector.shape_cast %44 : vector<1x1x8xf32> to vector<1x8xf32>
    %46 = vector.broadcast %45 : vector<1x8xf32> to vector<8x8xf32>
    %47 = arith.addf %43, %46 : vector<8x8xf32>
    %48 = vector.extract_strided_slice %37 {offsets = [0, 0], sizes = [8, 16], strides = [1, 1]} : vector<8x96xf32> to vector<8x16xf32>
    %49 = vector.extract_strided_slice %37 {offsets = [0, 32], sizes = [8, 16], strides = [1, 1]} : vector<8x96xf32> to vector<8x16xf32>
    %50 = vector.extract_strided_slice %37 {offsets = [0, 64], sizes = [8, 16], strides = [1, 1]} : vector<8x96xf32> to vector<8x16xf32>
    %51 = arith.truncf %48 : vector<8x16xf32> to vector<8x16xbf16>
    %52 = arith.truncf %49 : vector<8x16xf32> to vector<8x16xbf16>
    %cst_24 = arith.constant dense<0.000000e+00> : vector<8x8xf32>
    %53 = tpu.matmul %51, %52, %cst_24 {dimension_numbers = #tpu.dot_dimension_numbers<[1], [1], [0], [0], [0, 0, 1, 0], [], []>} : vector<8x16xbf16>, vector<8x16xbf16>, vector<8x8xf32> -> vector<8x8xf32>
    %cst_25 = arith.constant 2.500000e-01 : f32
    %54 = vector.broadcast %cst_25 : f32 to vector<8x8xf32>
    %55 = arith.mulf %53, %54 : vector<8x8xf32>
    %56 = arith.addf %55, %47 : vector<8x8xf32>
    %cst_26 = arith.constant dense<0xFF800000> : vector<8xf32>
    %57 = vector.multi_reduction <maximumf>, %56, %cst_26 [1] : vector<8x8xf32> to vector<8xf32>
    %58 = vector.shape_cast %57 : vector<8xf32> to vector<8x1xf32>
    %59 = vector.broadcast %58 : vector<8x1xf32> to vector<8x8xf32>
    %60 = arith.subf %56, %59 : vector<8x8xf32>
    %61 = math.exp %60 : vector<8x8xf32>
    %cst_27 = arith.constant dense<0.000000e+00> : vector<8xf32>
    %62 = vector.multi_reduction <add>, %61, %cst_27 [1] : vector<8x8xf32> to vector<8xf32>
    %63 = vector.shape_cast %62 : vector<8xf32> to vector<8x1xf32>
    %64 = tpu.reciprocal %63 {approx = true} : vector<8x1xf32> -> vector<8x1xf32>
    %65 = vector.broadcast %64 : vector<8x1xf32> to vector<8x8xf32>
    %66 = arith.mulf %61, %65 : vector<8x8xf32>
    %67 = arith.truncf %66 : vector<8x8xf32> to vector<8x8xbf16>
    %68 = arith.truncf %50 : vector<8x16xf32> to vector<8x16xbf16>
    %cst_28 = arith.constant dense<0.000000e+00> : vector<8x16xf32>
    %69 = tpu.matmul %67, %68, %cst_28 {dimension_numbers = #tpu.dot_dimension_numbers<[1], [0], [0], [1], [0, 0, 1, 1], [], []>} : vector<8x8xbf16>, vector<8x16xbf16>, vector<8x16xf32> -> vector<8x16xf32>
    %70 = vector.extract_strided_slice %37 {offsets = [0, 16], sizes = [8, 16], strides = [1, 1]} : vector<8x96xf32> to vector<8x16xf32>
    %71 = vector.extract_strided_slice %37 {offsets = [0, 48], sizes = [8, 16], strides = [1, 1]} : vector<8x96xf32> to vector<8x16xf32>
    %72 = vector.extract_strided_slice %37 {offsets = [0, 80], sizes = [8, 16], strides = [1, 1]} : vector<8x96xf32> to vector<8x16xf32>
    %73 = arith.truncf %70 : vector<8x16xf32> to vector<8x16xbf16>
    %74 = arith.truncf %71 : vector<8x16xf32> to vector<8x16xbf16>
    %cst_29 = arith.constant dense<0.000000e+00> : vector<8x8xf32>
    %75 = tpu.matmul %73, %74, %cst_29 {dimension_numbers = #tpu.dot_dimension_numbers<[1], [1], [0], [0], [0, 0, 1, 0], [], []>} : vector<8x16xbf16>, vector<8x16xbf16>, vector<8x8xf32> -> vector<8x8xf32>
    %cst_30 = arith.constant 2.500000e-01 : f32
    %76 = vector.broadcast %cst_30 : f32 to vector<8x8xf32>
    %77 = arith.mulf %75, %76 : vector<8x8xf32>
    %78 = arith.addf %77, %47 : vector<8x8xf32>
    %cst_31 = arith.constant dense<0xFF800000> : vector<8xf32>
    %79 = vector.multi_reduction <maximumf>, %78, %cst_31 [1] : vector<8x8xf32> to vector<8xf32>
    %80 = vector.shape_cast %79 : vector<8xf32> to vector<8x1xf32>
    %81 = vector.broadcast %80 : vector<8x1xf32> to vector<8x8xf32>
    %82 = arith.subf %78, %81 : vector<8x8xf32>
    %83 = math.exp %82 : vector<8x8xf32>
    %cst_32 = arith.constant dense<0.000000e+00> : vector<8xf32>
    %84 = vector.multi_reduction <add>, %83, %cst_32 [1] : vector<8x8xf32> to vector<8xf32>
    %85 = vector.shape_cast %84 : vector<8xf32> to vector<8x1xf32>
    %86 = tpu.reciprocal %85 {approx = true} : vector<8x1xf32> -> vector<8x1xf32>
    %87 = vector.broadcast %86 : vector<8x1xf32> to vector<8x8xf32>
    %88 = arith.mulf %83, %87 : vector<8x8xf32>
    %89 = arith.truncf %88 : vector<8x8xf32> to vector<8x8xbf16>
    %90 = arith.truncf %72 : vector<8x16xf32> to vector<8x16xbf16>
    %cst_33 = arith.constant dense<0.000000e+00> : vector<8x16xf32>
    %91 = tpu.matmul %89, %90, %cst_33 {dimension_numbers = #tpu.dot_dimension_numbers<[1], [0], [0], [1], [0, 0, 1, 1], [], []>} : vector<8x8xbf16>, vector<8x16xbf16>, vector<8x16xf32> -> vector<8x16xf32>
    %92 = tpu.concatenate %69, %91 in 1 : vector<8x16xf32>, vector<8x16xf32> -> vector<8x32xf32>
    %93 = arith.truncf %92 : vector<8x32xf32> to vector<8x32xbf16>
    %c0_34 = arith.constant 0 : index
    %c0_35 = arith.constant 0 : index
    %c0_36 = arith.constant 0 : index
    %94 = vector.load %arg9[%c0_34, %c0_35, %c0_36] : memref<1x32x32xbf16, #tpu.memory_space<vmem>>, vector<1x32x32xbf16>
    %95 = vector.shape_cast %94 : vector<1x32x32xbf16> to vector<32x32xbf16>
    %cst_37 = arith.constant dense<0.000000e+00> : vector<8x32xf32>
    %96 = tpu.matmul %93, %95, %cst_37 {dimension_numbers = #tpu.dot_dimension_numbers<[1], [0], [0], [1], [0, 0, 1, 1], [], []>} : vector<8x32xbf16>, vector<32x32xbf16>, vector<8x32xf32> -> vector<8x32xf32>
    %c0_38 = arith.constant 0 : index
    %c0_39 = arith.constant 0 : index
    %c0_40 = arith.constant 0 : index
    %97 = vector.load %arg10[%c0_38, %c0_39, %c0_40] : memref<1x1x32xf32, #tpu.memory_space<vmem>>, vector<1x1x32xf32>
    %98 = vector.shape_cast %97 : vector<1x1x32xf32> to vector<1x32xf32>
    %99 = vector.broadcast %98 : vector<1x32xf32> to vector<8x32xf32>
    %100 = arith.addf %96, %99 : vector<8x32xf32>
    %101 = arith.addf %3, %100 : vector<8x32xf32>
    %cst_41 = arith.constant dense<0.000000e+00> : vector<8xf32>
    %102 = vector.multi_reduction <add>, %101, %cst_41 [1] : vector<8x32xf32> to vector<8xf32>
    %103 = vector.shape_cast %102 : vector<8xf32> to vector<8x1xf32>
    %cst_42 = arith.constant 3.200000e+01 : f32
    %104 = vector.broadcast %cst_42 : f32 to vector<8x1xf32>
    %105 = arith.divf %103, %104 : vector<8x1xf32>
    %106 = vector.broadcast %105 : vector<8x1xf32> to vector<8x32xf32>
    %107 = arith.subf %101, %106 : vector<8x32xf32>
    %108 = arith.mulf %107, %107 : vector<8x32xf32>
    %cst_43 = arith.constant dense<0.000000e+00> : vector<8xf32>
    %109 = vector.multi_reduction <add>, %108, %cst_43 [1] : vector<8x32xf32> to vector<8xf32>
    %110 = vector.shape_cast %109 : vector<8xf32> to vector<8x1xf32>
    %cst_44 = arith.constant 3.200000e+01 : f32
    %111 = vector.broadcast %cst_44 : f32 to vector<8x1xf32>
    %112 = arith.divf %110, %111 : vector<8x1xf32>
    %113 = vector.broadcast %105 : vector<8x1xf32> to vector<8x32xf32>
    %114 = arith.subf %101, %113 : vector<8x32xf32>
    %cst_45 = arith.constant 9.99999974E-6 : f32
    %115 = vector.broadcast %cst_45 : f32 to vector<8x1xf32>
    %116 = arith.addf %112, %115 : vector<8x1xf32>
    %117 = math.rsqrt %116 : vector<8x1xf32>
    %118 = vector.broadcast %117 : vector<8x1xf32> to vector<8x32xf32>
    %119 = arith.mulf %114, %118 : vector<8x32xf32>
    %c0_46 = arith.constant 0 : index
    %c0_47 = arith.constant 0 : index
    %c0_48 = arith.constant 0 : index
    %120 = vector.load %arg11[%c0_46, %c0_47, %c0_48] : memref<1x1x32xf32, #tpu.memory_space<vmem>>, vector<1x1x32xf32>
    %121 = vector.shape_cast %120 : vector<1x1x32xf32> to vector<1x32xf32>
    %122 = vector.broadcast %121 : vector<1x32xf32> to vector<8x32xf32>
    %123 = arith.mulf %119, %122 : vector<8x32xf32>
    %c0_49 = arith.constant 0 : index
    %c0_50 = arith.constant 0 : index
    %c0_51 = arith.constant 0 : index
    %124 = vector.load %arg12[%c0_49, %c0_50, %c0_51] : memref<1x1x32xf32, #tpu.memory_space<vmem>>, vector<1x1x32xf32>
    %125 = vector.shape_cast %124 : vector<1x1x32xf32> to vector<1x32xf32>
    %126 = vector.broadcast %125 : vector<1x32xf32> to vector<8x32xf32>
    %127 = arith.addf %123, %126 : vector<8x32xf32>
    %128 = arith.truncf %127 : vector<8x32xf32> to vector<8x32xbf16>
    %c0_52 = arith.constant 0 : index
    %c0_53 = arith.constant 0 : index
    %c0_54 = arith.constant 0 : index
    %129 = vector.load %arg13[%c0_52, %c0_53, %c0_54] : memref<1x32x128xbf16, #tpu.memory_space<vmem>>, vector<1x32x128xbf16>
    %130 = vector.shape_cast %129 : vector<1x32x128xbf16> to vector<32x128xbf16>
    %cst_55 = arith.constant dense<0.000000e+00> : vector<8x128xf32>
    %131 = tpu.matmul %128, %130, %cst_55 {dimension_numbers = #tpu.dot_dimension_numbers<[1], [0], [0], [1], [0, 0, 1, 1], [], []>} : vector<8x32xbf16>, vector<32x128xbf16>, vector<8x128xf32> -> vector<8x128xf32>
    %c0_56 = arith.constant 0 : index
    %c0_57 = arith.constant 0 : index
    %c0_58 = arith.constant 0 : index
    %132 = vector.load %arg14[%c0_56, %c0_57, %c0_58] : memref<1x1x128xf32, #tpu.memory_space<vmem>>, vector<1x1x128xf32>
    %133 = vector.shape_cast %132 : vector<1x1x128xf32> to vector<1x128xf32>
    %134 = vector.broadcast %133 : vector<1x128xf32> to vector<8x128xf32>
    %135 = arith.addf %131, %134 : vector<8x128xf32>
    %cst_59 = arith.constant 5.000000e-01 : f32
    %136 = vector.broadcast %cst_59 : f32 to vector<8x128xf32>
    %137 = arith.mulf %136, %135 : vector<8x128xf32>
    %cst_60 = arith.constant 4.471500e-02 : f32
    %138 = vector.broadcast %cst_60 : f32 to vector<8x128xf32>
    %139 = arith.mulf %138, %135 : vector<8x128xf32>
    %140 = arith.mulf %139, %135 : vector<8x128xf32>
    %141 = arith.mulf %140, %135 : vector<8x128xf32>
    %142 = arith.addf %135, %141 : vector<8x128xf32>
    %cst_61 = arith.constant 0.797884583 : f32
    %143 = vector.broadcast %cst_61 : f32 to vector<8x128xf32>
    %144 = arith.mulf %143, %142 : vector<8x128xf32>
    %145 = math.tanh %144 : vector<8x128xf32>
    %cst_62 = arith.constant 1.000000e+00 : f32
    %146 = vector.broadcast %cst_62 : f32 to vector<8x128xf32>
    %147 = arith.addf %146, %145 : vector<8x128xf32>
    %148 = arith.mulf %137, %147 : vector<8x128xf32>
    %149 = arith.truncf %148 : vector<8x128xf32> to vector<8x128xbf16>
    %c0_63 = arith.constant 0 : index
    %c0_64 = arith.constant 0 : index
    %c0_65 = arith.constant 0 : index
    %150 = vector.load %arg15[%c0_63, %c0_64, %c0_65] : memref<1x128x32xbf16, #tpu.memory_space<vmem>>, vector<1x128x32xbf16>
    %151 = vector.shape_cast %150 : vector<1x128x32xbf16> to vector<128x32xbf16>
    %cst_66 = arith.constant dense<0.000000e+00> : vector<8x32xf32>
    %152 = tpu.matmul %149, %151, %cst_66 {dimension_numbers = #tpu.dot_dimension_numbers<[1], [0], [0], [1], [0, 0, 1, 1], [], []>} : vector<8x128xbf16>, vector<128x32xbf16>, vector<8x32xf32> -> vector<8x32xf32>
    %c0_67 = arith.constant 0 : index
    %c0_68 = arith.constant 0 : index
    %c0_69 = arith.constant 0 : index
    %153 = vector.load %arg16[%c0_67, %c0_68, %c0_69] : memref<1x1x32xf32, #tpu.memory_space<vmem>>, vector<1x1x32xf32>
    %154 = vector.shape_cast %153 : vector<1x1x32xf32> to vector<1x32xf32>
    %155 = vector.broadcast %154 : vector<1x32xf32> to vector<8x32xf32>
    %156 = arith.addf %152, %155 : vector<8x32xf32>
    %157 = arith.addf %101, %156 : vector<8x32xf32>
    %c0_70 = arith.constant 0 : index
    %c0_71 = arith.constant 0 : index
    %158 = vector.load %arg21[%c0_70, %c0_71] : memref<8x32xf32, #tpu.memory_space<vmem>>, vector<8x32xf32>
    tpu.vector_store %arg21[%c0_70, %c0_71], %157 {strides = array<i32>} : memref<8x32xf32, #tpu.memory_space<vmem>>, vector<8x32xf32>,
    %c1_i32 = arith.constant 1 : i32
    %159 = arith.cmpi eq, %arg1, %c1_i32 : i32
    %160 = arith.extui %159 : i1 to i32
    %c0_i32_72 = arith.constant 0 : i32
    %161 = arith.cmpi ne, %160, %c0_i32_72 : i32
    scf.if %161 {
      %162 = arith.index_cast %arg0 : i32 to index
      %163 = memref.load %arg2[%162] : memref<2xi32, #tpu.memory_space<smem>>
      %164 = tpu.iota {dimensions = array<i32: 0>} : vector<8x1xi32>
      %165 = vector.broadcast %163 : i32 to vector<8x1xi32>
      %166 = arith.cmpi eq, %164, %165 : vector<8x1xi32>
      %167 = arith.extui %166 : vector<8x1xi1> to vector<8x1xi32>
      %168 = arith.sitofp %167 : vector<8x1xi32> to vector<8x1xf32>
      %169 = vector.broadcast %168 : vector<8x1xf32> to vector<8x32xf32>
      %170 = arith.mulf %157, %169 : vector<8x32xf32>
      %cst_73 = arith.constant dense<0.000000e+00> : vector<32xf32>
      %171 = vector.multi_reduction <add>, %170, %cst_73 [0] : vector<8x32xf32> to vector<32xf32>
      %172 = vector.shape_cast %171 : vector<32xf32> to vector<1x32xf32>
      %cst_74 = arith.constant dense<0.000000e+00> : vector<1xf32>
      %173 = vector.multi_reduction <add>, %172, %cst_74 [1] : vector<1x32xf32> to vector<1xf32>
      %174 = vector.shape_cast %173 : vector<1xf32> to vector<1x1xf32>
      %cst_75 = arith.constant 3.200000e+01 : f32
      %175 = vector.broadcast %cst_75 : f32 to vector<1x1xf32>
      %176 = arith.divf %174, %175 : vector<1x1xf32>
      %177 = vector.broadcast %176 : vector<1x1xf32> to vector<1x32xf32>
      %178 = arith.subf %172, %177 : vector<1x32xf32>
      %179 = arith.mulf %178, %178 : vector<1x32xf32>
      %cst_76 = arith.constant dense<0.000000e+00> : vector<1xf32>
      %180 = vector.multi_reduction <add>, %179, %cst_76 [1] : vector<1x32xf32> to vector<1xf32>
      %181 = vector.shape_cast %180 : vector<1xf32> to vector<1x1xf32>
      %cst_77 = arith.constant 3.200000e+01 : f32
      %182 = vector.broadcast %cst_77 : f32 to vector<1x1xf32>
      %183 = arith.divf %181, %182 : vector<1x1xf32>
      %184 = vector.broadcast %176 : vector<1x1xf32> to vector<1x32xf32>
      %185 = arith.subf %172, %184 : vector<1x32xf32>
      %cst_78 = arith.constant 9.99999974E-6 : f32
      %186 = vector.broadcast %cst_78 : f32 to vector<1x1xf32>
      %187 = arith.addf %183, %186 : vector<1x1xf32>
      %188 = math.rsqrt %187 : vector<1x1xf32>
      %189 = vector.broadcast %188 : vector<1x1xf32> to vector<1x32xf32>
      %190 = arith.mulf %185, %189 : vector<1x32xf32>
      %c0_79 = arith.constant 0 : index
      %c0_80 = arith.constant 0 : index
      %191 = vector.load %arg17[%c0_79, %c0_80] : memref<1x32xf32, #tpu.memory_space<vmem>>, vector<1x32xf32>
      %192 = arith.mulf %190, %191 : vector<1x32xf32>
      %c0_81 = arith.constant 0 : index
      %c0_82 = arith.constant 0 : index
      %193 = vector.load %arg18[%c0_81, %c0_82] : memref<1x32xf32, #tpu.memory_space<vmem>>, vector<1x32xf32>
      %194 = arith.addf %192, %193 : vector<1x32xf32>
      %195 = arith.truncf %194 : vector<1x32xf32> to vector<1x32xbf16>
      %c0_83 = arith.constant 0 : index
      %c0_84 = arith.constant 0 : index
      %196 = vector.load %arg19[%c0_83, %c0_84] : memref<32x6xbf16, #tpu.memory_space<vmem>>, vector<32x6xbf16>
      %cst_85 = arith.constant dense<0.000000e+00> : vector<1x6xf32>
      %197 = tpu.matmul %195, %196, %cst_85 {dimension_numbers = #tpu.dot_dimension_numbers<[1], [0], [0], [1], [0, 0, 1, 1], [], []>} : vector<1x32xbf16>, vector<32x6xbf16>, vector<1x6xf32> -> vector<1x6xf32>
      %c0_86 = arith.constant 0 : index
      %c0_87 = arith.constant 0 : index
      %c0_88 = arith.constant 0 : index
      %198 = vector.load %arg20[%c0_86, %c0_87, %c0_88] : memref<1x1x6xf32, #tpu.memory_space<vmem>>, vector<1x1x6xf32>
      %199 = vector.shape_cast %198 : vector<1x1x6xf32> to vector<1x6xf32>
      %200 = vector.shape_cast %197 : vector<1x6xf32> to vector<1x1x6xf32>
      tpu.vector_store %arg20[%c0_86, %c0_87, %c0_88], %200 {strides = array<i32>} : memref<1x1x6xf32, #tpu.memory_space<vmem>>, vector<1x1x6xf32>,
    } else {
    }
    return
  }
  func.func @transform_0(%arg0: i32, %arg1: i32, %arg2: memref<2xi32, #tpu.memory_space<smem>>) -> (i32, i32, i32) {
    %c0_i32 = arith.constant 0 : i32
    %c0_i32_0 = arith.constant 0 : i32
    %c0_i32_1 = arith.constant 0 : i32
    return %arg0, %c0_i32, %c0_i32_0 : i32, i32, i32
  }
  func.func @transform_1(%arg0: i32, %arg1: i32, %arg2: memref<2xi32, #tpu.memory_space<smem>>) -> (i32, i32, i32) {
    %c0_i32 = arith.constant 0 : i32
    %c0_i32_0 = arith.constant 0 : i32
    %c0_i32_1 = arith.constant 0 : i32
    return %arg0, %c0_i32, %c0_i32_0 : i32, i32, i32
  }
  func.func @transform_2(%arg0: i32, %arg1: i32, %arg2: memref<2xi32, #tpu.memory_space<smem>>) -> (i32, i32, i32) {
    %c0_i32 = arith.constant 0 : i32
    %c0_i32_0 = arith.constant 0 : i32
    %c0_i32_1 = arith.constant 0 : i32
    return %arg1, %c0_i32, %c0_i32_0 : i32, i32, i32
  }
  func.func @transform_3(%arg0: i32, %arg1: i32, %arg2: memref<2xi32, #tpu.memory_space<smem>>) -> (i32, i32, i32) {
    %c0_i32 = arith.constant 0 : i32
    %c0_i32_0 = arith.constant 0 : i32
    %c0_i32_1 = arith.constant 0 : i32
    return %arg1, %c0_i32, %c0_i32_0 : i32, i32, i32
  }
  func.func @transform_4(%arg0: i32, %arg1: i32, %arg2: memref<2xi32, #tpu.memory_space<smem>>) -> (i32, i32, i32) {
    %c0_i32 = arith.constant 0 : i32
    %c0_i32_0 = arith.constant 0 : i32
    %c0_i32_1 = arith.constant 0 : i32
    return %arg1, %c0_i32, %c0_i32_0 : i32, i32, i32
  }
  func.func @transform_5(%arg0: i32, %arg1: i32, %arg2: memref<2xi32, #tpu.memory_space<smem>>) -> (i32, i32, i32) {
    %c0_i32 = arith.constant 0 : i32
    %c0_i32_0 = arith.constant 0 : i32
    %c0_i32_1 = arith.constant 0 : i32
    return %arg1, %c0_i32, %c0_i32_0 : i32, i32, i32
  }
  func.func @transform_6(%arg0: i32, %arg1: i32, %arg2: memref<2xi32, #tpu.memory_space<smem>>) -> (i32, i32, i32) {
    %c0_i32 = arith.constant 0 : i32
    %c0_i32_0 = arith.constant 0 : i32
    %c0_i32_1 = arith.constant 0 : i32
    return %arg1, %c0_i32, %c0_i32_0 : i32, i32, i32
  }
  func.func @transform_7(%arg0: i32, %arg1: i32, %arg2: memref<2xi32, #tpu.memory_space<smem>>) -> (i32, i32, i32) {
    %c0_i32 = arith.constant 0 : i32
    %c0_i32_0 = arith.constant 0 : i32
    %c0_i32_1 = arith.constant 0 : i32
    return %arg1, %c0_i32, %c0_i32_0 : i32, i32, i32
  }
  func.func @transform_8(%arg0: i32, %arg1: i32, %arg2: memref<2xi32, #tpu.memory_space<smem>>) -> (i32, i32, i32) {
    %c0_i32 = arith.constant 0 : i32
    %c0_i32_0 = arith.constant 0 : i32
    %c0_i32_1 = arith.constant 0 : i32
    return %arg1, %c0_i32, %c0_i32_0 : i32, i32, i32
  }
  func.func @transform_9(%arg0: i32, %arg1: i32, %arg2: memref<2xi32, #tpu.memory_space<smem>>) -> (i32, i32, i32) {
    %c0_i32 = arith.constant 0 : i32
    %c0_i32_0 = arith.constant 0 : i32
    %c0_i32_1 = arith.constant 0 : i32
    return %arg1, %c0_i32, %c0_i32_0 : i32, i32, i32
  }
  func.func @transform_10(%arg0: i32, %arg1: i32, %arg2: memref<2xi32, #tpu.memory_space<smem>>) -> (i32, i32, i32) {
    %c0_i32 = arith.constant 0 : i32
    %c0_i32_0 = arith.constant 0 : i32
    %c0_i32_1 = arith.constant 0 : i32
    return %arg1, %c0_i32, %c0_i32_0 : i32, i32, i32
  }
  func.func @transform_11(%arg0: i32, %arg1: i32, %arg2: memref<2xi32, #tpu.memory_space<smem>>) -> (i32, i32, i32) {
    %c0_i32 = arith.constant 0 : i32
    %c0_i32_0 = arith.constant 0 : i32
    %c0_i32_1 = arith.constant 0 : i32
    return %arg1, %c0_i32, %c0_i32_0 : i32, i32, i32
  }
  func.func @transform_12(%arg0: i32, %arg1: i32, %arg2: memref<2xi32, #tpu.memory_space<smem>>) -> (i32, i32, i32) {
    %c0_i32 = arith.constant 0 : i32
    %c0_i32_0 = arith.constant 0 : i32
    %c0_i32_1 = arith.constant 0 : i32
    return %arg1, %c0_i32, %c0_i32_0 : i32, i32, i32
  }
  func.func @transform_13(%arg0: i32, %arg1: i32, %arg2: memref<2xi32, #tpu.memory_space<smem>>) -> (i32, i32, i32) {
    %c0_i32 = arith.constant 0 : i32
    %c0_i32_0 = arith.constant 0 : i32
    %c0_i32_1 = arith.constant 0 : i32
    return %arg1, %c0_i32, %c0_i32_0 : i32, i32, i32
  }
  func.func @transform_14(%arg0: i32, %arg1: i32, %arg2: memref<2xi32, #tpu.memory_space<smem>>) -> (i32, i32) {
    %c0_i32 = arith.constant 0 : i32
    %c0_i32_0 = arith.constant 0 : i32
    %c0_i32_1 = arith.constant 0 : i32
    return %c0_i32, %c0_i32_0 : i32, i32
  }
  func.func @transform_15(%arg0: i32, %arg1: i32, %arg2: memref<2xi32, #tpu.memory_space<smem>>) -> (i32, i32) {
    %c0_i32 = arith.constant 0 : i32
    %c0_i32_0 = arith.constant 0 : i32
    %c0_i32_1 = arith.constant 0 : i32
    return %c0_i32, %c0_i32_0 : i32, i32
  }
  func.func @transform_16(%arg0: i32, %arg1: i32, %arg2: memref<2xi32, #tpu.memory_space<smem>>) -> (i32, i32) {
    %c0_i32 = arith.constant 0 : i32
    %c0_i32_0 = arith.constant 0 : i32
    %c0_i32_1 = arith.constant 0 : i32
    return %c0_i32, %c0_i32_0 : i32, i32
  }
  func.func @transform_17(%arg0: i32, %arg1: i32, %arg2: memref<2xi32, #tpu.memory_space<smem>>) -> (i32, i32, i32) {
    %c0_i32 = arith.constant 0 : i32
    %c0_i32_0 = arith.constant 0 : i32
    %c0_i32_1 = arith.constant 0 : i32
    return %arg0, %c0_i32, %c0_i32_0 : i32, i32, i32
  }
}

</mosaic_0001>

<llo_original>
// kernel: gpt2_merged_forward.1
$region0: #{gpt2_merged_forward.1}
  #allocation0 [shape = 'u32[]', space=smem, size = 0x4, offset = 0x4, fixed_abs, tag = 'smem constant byte address 0x4 - core index']
  #allocation1 [shape = 'u32[144,128]{1,0:T(1,128)}', space=vmem, size = 0x12000, scoped, tag = 'internal scratch']
  #allocation2 [shape = 'f32[8,32]{1,0:T(8,128)}', space=vmem, size = 0x1000, scoped, tag = 'scratch operand']
  #allocation3 [shape = 's32[1]{0}', space=sflag, size = 0x4, scoped, tag = 'scoped memory for gpt2_merged_forward.1']
  #allocation4 [shape = 'u8[512]{0}', space=smem, size = 0x200, scoped, tag = 'prefetched SMEM operand 0']
  %s0 = inlined_call_operand.vmem [shape: s32[2], index: 0, kind: input, shape index: {}]
  %s1 = inlined_call_operand.vmem [shape: f32[2,8,32], index: 1, kind: input, shape index: {}]
  %s2 = inlined_call_operand.vmem [shape: f32[2,1,8], index: 2, kind: input, shape index: {}]
  %s3 = inlined_call_operand.vmem [shape: f32[2,1,32], index: 3, kind: input, shape index: {}]
  %s4 = inlined_call_operand.vmem [shape: f32[2,1,32], index: 4, kind: input, shape index: {}]
  %s5 = inlined_call_operand.vmem [shape: bf16[2,32,96], index: 5, kind: input, shape index: {}]
  %s6 = inlined_call_operand.vmem [shape: f32[2,1,96], index: 6, kind: input, shape index: {}]
  %s7 = inlined_call_operand.vmem [shape: bf16[2,32,32], index: 7, kind: input, shape index: {}]
  %s8 = inlined_call_operand.vmem [shape: f32[2,1,32], index: 8, kind: input, shape index: {}]
  %s9 = inlined_call_operand.vmem [shape: f32[2,1,32], index: 9, kind: input, shape index: {}]
  %s10 = inlined_call_operand.vmem [shape: f32[2,1,32], index: 10, kind: input, shape index: {}]
  %s11 = inlined_call_operand.vmem [shape: bf16[2,32,128], index: 11, kind: input, shape index: {}]
  %s12 = inlined_call_operand.vmem [shape: f32[2,1,128], index: 12, kind: input, shape index: {}]
  %s13 = inlined_call_operand.vmem [shape: bf16[2,128,32], index: 13, kind: input, shape index: {}]
  %s14 = inlined_call_operand.vmem [shape: f32[2,1,32], index: 14, kind: input, shape index: {}]
  %s15 = inlined_call_operand.vmem [shape: f32[1,32], index: 15, kind: input, shape index: {}]
  %s16 = inlined_call_operand.vmem [shape: f32[1,32], index: 16, kind: input, shape index: {}]
  %s17 = inlined_call_operand.vmem [shape: bf16[32,6], index: 17, kind: input, shape index: {}]
  %s18 = inlined_call_operand.vmem [shape: f32[2,1,6], index: 18, kind: output, shape index: {}]
  %s19 = sld [smem:[#allocation0]]
  $region109: #{gpt2_merged_forward.1} parent=0
    _
  %s21 = ssub.s32 1, %s19
  %s22 = scalar_select 0, %s21, %s19
  %s23 = sshll.u32 %s0, 4
  %s24 = int_to_ptr.vmem [resolvable:$true] %s23
  %26 = dma.vmem_to_smem %s24, 16, [#allocation4], [#allocation3]
  %27 = dma.done [#allocation3], 16
  %28 = sfence
  loop: start=0, step=1, limit=6
  $region2: #{gpt2_merged_forward.1} parent=0 // loop_pre_header
    _
  $region3: #{gpt2_merged_forward.1} parent=0 // loop_header
    %s30 = sphi 0, %s34
    %p31 = scmp.ge.s32.totalorder %s30, 6
    %s37 = sphi 0, %s49
    %s38 = sphi 0, %s45
    %s39 = sphi 0, %s37
    %s40 = sphi 0, %s38
    %s41 = sphi 0, %s39
    %s42 = sphi 0, %s40
    %s52 = sphi 0, %s54
    %s55 = sphi 0, %s52
    %s56 = sphi 0, %s55
    %s72 = sphi 0, %s56
    %s78 = sphi 0, %s80
    %s81 = sphi 0, %s78
    %s82 = sphi 0, %s81
    %s98 = sphi 0, %s82
    %s104 = sphi 0, %s106
    %s107 = sphi 0, %s104
    %s108 = sphi 0, %s107
    %s124 = sphi 0, %s108
    %s130 = sphi 0, %s132
    %s133 = sphi 0, %s130
    %s134 = sphi 0, %s133
    %s150 = sphi 0, %s134
    %s156 = sphi 0, %s158
    %s159 = sphi 0, %s156
    %s160 = sphi 0, %s159
    %s176 = sphi 0, %s160
    %s182 = sphi 0, %s184
    %s185 = sphi 0, %s182
    %s186 = sphi 0, %s185
    %s202 = sphi 0, %s186
    %s208 = sphi 0, %s210
    %s211 = sphi 0, %s208
    %s212 = sphi 0, %s211
    %s228 = sphi 0, %s212
    %s234 = sphi 0, %s236
    %s237 = sphi 0, %s234
    %s238 = sphi 0, %s237
    %s254 = sphi 0, %s238
    %s260 = sphi 0, %s262
    %s263 = sphi 0, %s260
    %s264 = sphi 0, %s263
    %s280 = sphi 0, %s264
    %s286 = sphi 0, %s288
    %s289 = sphi 0, %s286
    %s290 = sphi 0, %s289
    %s306 = sphi 0, %s290
    %s312 = sphi 0, %s314
    %s315 = sphi 0, %s312
    %s316 = sphi 0, %s315
    %s332 = sphi 0, %s316
    %s338 = sphi 0, %s340
    %s341 = sphi 0, %s338
    %s342 = sphi 0, %s341
    %s358 = sphi 0, %s342
    %s364 = sphi 0, %s366
    %s367 = sphi 0, %s364
    %s368 = sphi 0, %s367
    %s384 = sphi 0, %s368
    %s390 = sphi 0, %s392
    %s393 = sphi 0, %s390
    %s394 = sphi 0, %s393
    %s410 = sphi 0, %s394
    %s414 = sphi 0, %s414
    %s416 = sphi 0, %s414
    %s417 = sphi 0, %s416
    %s431 = sphi 0, %s417
    %s435 = sphi 0, %s435
    %s437 = sphi 0, %s435
    %s438 = sphi 0, %s437
    %s452 = sphi 0, %s438
    %s456 = sphi 0, %s456
    %s458 = sphi 0, %s456
    %s459 = sphi 0, %s458
    %s473 = sphi 0, %s459
    %s479 = sphi 0, %s481
    %s482 = sphi 0, %s479
    %s483 = sphi 0, %s482
    %s499 = sphi 0, %s483
  $region4: #{gpt2_merged_forward.1} parent=0 // loop_header_branch
    %33 = sbr.rel (%p31) target = $region8
  $region5: #{gpt2_merged_forward.1} parent=0 // loop_body
    %s35 = ssub.s32 %s30, 1
    %s36 = ssub.s32 %s30, 2
    %s43 = sadd.s32 1, %s38
    %p44 = scmp.ge.s32.totalorder %s43, 2
    %s45 = scalar_select %p44, 0, %s43
    %s46 = sadd.s32 1, %s37
    %s47 = scalar_select %p44, %s46, %s37
    %p48 = scmp.ge.s32.totalorder %s47, 2
    %s49 = scalar_select %p48, 0, %s47
    %s50 = ssub.s32 %s37, %s49
    %p51 = scmp.eq.s32.totalorder %s50, 0
    %s53 = sadd.s32 %s52, 1
    %s54 = scalar_select %p51, %s52, %s53
    %p57 = pneg %p51
    %p58 = scmp.eq.s32.totalorder %s30, 3
    %p59 = por %p57, %p58
    %p60 = scmp.ne.s32.totalorder %s52, %s55
    %p61 = scmp.eq.s32.totalorder %s30, 0
    %p62 = por %p60, %p61
    %p63 = scmp.ne.s32.totalorder %s52, %s55
    %p64 = scmp.eq.s32.totalorder %s35, 3
    %p65 = por %p63, %p64
    %p66 = scmp.ne.s32.totalorder %s55, %s56
    %p67 = scmp.eq.s32.totalorder %s35, 0
    %p68 = por %p66, %p67
    %p69 = scmp.ne.s32.totalorder %s55, %s56
    %p70 = scmp.eq.s32.totalorder %s36, 3
    %p71 = por %p69, %p70
    %p73 = scmp.ne.s32.totalorder %s56, %s72
    %p74 = scmp.eq.s32.totalorder %s36, 0
    %p75 = por %p73, %p74
    %s76 = ssub.s32 %s37, %s49
    %p77 = scmp.eq.s32.totalorder %s76, 0
    %s79 = sadd.s32 %s78, 1
    %s80 = scalar_select %p77, %s78, %s79
    %p83 = pneg %p77
    %p84 = scmp.eq.s32.totalorder %s30, 3
    %p85 = por %p83, %p84
    %p86 = scmp.ne.s32.totalorder %s78, %s81
    %p87 = scmp.eq.s32.totalorder %s30, 0
    %p88 = por %p86, %p87
    %p89 = scmp.ne.s32.totalorder %s78, %s81
    %p90 = scmp.eq.s32.totalorder %s35, 3
    %p91 = por %p89, %p90
    %p92 = scmp.ne.s32.totalorder %s81, %s82
    %p93 = scmp.eq.s32.totalorder %s35, 0
    %p94 = por %p92, %p93
    %p95 = scmp.ne.s32.totalorder %s81, %s82
    %p96 = scmp.eq.s32.totalorder %s36, 3
    %p97 = por %p95, %p96
    %p99 = scmp.ne.s32.totalorder %s82, %s98
    %p100 = scmp.eq.s32.totalorder %s36, 0
    %p101 = por %p99, %p100
    %s102 = ssub.s32 %s38, %s45
    %p103 = scmp.eq.s32.totalorder %s102, 0
    %s105 = sadd.s32 %s104, 1
    %s106 = scalar_select %p103, %s104, %s105
    %p109 = pneg %p103
    %p110 = scmp.eq.s32.totalorder %s30, 3
    %p111 = por %p109, %p110
    %p112 = scmp.ne.s32.totalorder %s104, %s107
    %p113 = scmp.eq.s32.totalorder %s30, 0
    %p114 = por %p112, %p113
    %p115 = scmp.ne.s32.totalorder %s104, %s107
    %p116 = scmp.eq.s32.totalorder %s35, 3
    %p117 = por %p115, %p116
    %p118 = scmp.ne.s32.totalorder %s107, %s108
    %p119 = scmp.eq.s32.totalorder %s35, 0
    %p120 = por %p118, %p119
    %p121 = scmp.ne.s32.totalorder %s107, %s108
    %p122 = scmp.eq.s32.totalorder %s36, 3
    %p123 = por %p121, %p122
    %p125 = scmp.ne.s32.totalorder %s108, %s124
    %p126 = scmp.eq.s32.totalorder %s36, 0
    %p127 = por %p125, %p126
    %s128 = ssub.s32 %s38, %s45
    %p129 = scmp.eq.s32.totalorder %s128, 0
    %s131 = sadd.s32 %s130, 1
    %s132 = scalar_select %p129, %s130, %s131
    %p135 = pneg %p129
    %p136 = scmp.eq.s32.totalorder %s30, 3
    %p137 = por %p135, %p136
    %p138 = scmp.ne.s32.totalorder %s130, %s133
    %p139 = scmp.eq.s32.totalorder %s30, 0
    %p140 = por %p138, %p139
    %p141 = scmp.ne.s32.totalorder %s130, %s133
    %p142 = scmp.eq.s32.totalorder %s35, 3
    %p143 = por %p141, %p142
    %p144 = scmp.ne.s32.totalorder %s133, %s134
    %p145 = scmp.eq.s32.totalorder %s35, 0
    %p146 = por %p144, %p145
    %p147 = scmp.ne.s32.totalorder %s133, %s134
    %p148 = scmp.eq.s32.totalorder %s36, 3
    %p149 = por %p147, %p148
    %p151 = scmp.ne.s32.totalorder %s134, %s150
    %p152 = scmp.eq.s32.totalorder %s36, 0
    %p153 = por %p151, %p152
    %s154 = ssub.s32 %s38, %s45
    %p155 = scmp.eq.s32.totalorder %s154, 0
    %s157 = sadd.s32 %s156, 1
    %s158 = scalar_select %p155, %s156, %s157
    %p161 = pneg %p155
    %p162 = scmp.eq.s32.totalorder %s30, 3
    %p163 = por %p161, %p162
    %p164 = scmp.ne.s32.totalorder %s156, %s159
    %p165 = scmp.eq.s32.totalorder %s30, 0
    %p166 = por %p164, %p165
    %p167 = scmp.ne.s32.totalorder %s156, %s159
    %p168 = scmp.eq.s32.totalorder %s35, 3
    %p169 = por %p167, %p168
    %p170 = scmp.ne.s32.totalorder %s159, %s160
    %p171 = scmp.eq.s32.totalorder %s35, 0
    %p172 = por %p170, %p171
    %p173 = scmp.ne.s32.totalorder %s159, %s160
    %p174 = scmp.eq.s32.totalorder %s36, 3
    %p175 = por %p173, %p174
    %p177 = scmp.ne.s32.totalorder %s160, %s176
    %p178 = scmp.eq.s32.totalorder %s36, 0
    %p179 = por %p177, %p178
    %s180 = ssub.s32 %s38, %s45
    %p181 = scmp.eq.s32.totalorder %s180, 0
    %s183 = sadd.s32 %s182, 1
    %s184 = scalar_select %p181, %s182, %s183
    %p187 = pneg %p181
    %p188 = scmp.eq.s32.totalorder %s30, 3
    %p189 = por %p187, %p188
    %p190 = scmp.ne.s32.totalorder %s182, %s185
    %p191 = scmp.eq.s32.totalorder %s30, 0
    %p192 = por %p190, %p191
    %p193 = scmp.ne.s32.totalorder %s182, %s185
    %p194 = scmp.eq.s32.totalorder %s35, 3
    %p195 = por %p193, %p194
    %p196 = scmp.ne.s32.totalorder %s185, %s186
    %p197 = scmp.eq.s32.totalorder %s35, 0
    %p198 = por %p196, %p197
    %p199 = scmp.ne.s32.totalorder %s185, %s186
    %p200 = scmp.eq.s32.totalorder %s36, 3
    %p201 = por %p199, %p200
    %p203 = scmp.ne.s32.totalorder %s186, %s202
    %p204 = scmp.eq.s32.totalorder %s36, 0
    %p205 = por %p203, %p204
    %s206 = ssub.s32 %s38, %s45
    %p207 = scmp.eq.s32.totalorder %s206, 0
    %s209 = sadd.s32 %s208, 1
    %s210 = scalar_select %p207, %s208, %s209
    %p213 = pneg %p207
    %p214 = scmp.eq.s32.totalorder %s30, 3
    %p215 = por %p213, %p214
    %p216 = scmp.ne.s32.totalorder %s208, %s211
    %p217 = scmp.eq.s32.totalorder %s30, 0
    %p218 = por %p216, %p217
    %p219 = scmp.ne.s32.totalorder %s208, %s211
    %p220 = scmp.eq.s32.totalorder %s35, 3
    %p221 = por %p219, %p220
    %p222 = scmp.ne.s32.totalorder %s211, %s212
    %p223 = scmp.eq.s32.totalorder %s35, 0
    %p224 = por %p222, %p223
    %p225 = scmp.ne.s32.totalorder %s211, %s212
    %p226 = scmp.eq.s32.totalorder %s36, 3
    %p227 = por %p225, %p226
    %p229 = scmp.ne.s32.totalorder %s212, %s228
    %p230 = scmp.eq.s32.totalorder %s36, 0
    %p231 = por %p229, %p230
    %s232 = ssub.s32 %s38, %s45
    %p233 = scmp.eq.s32.totalorder %s232, 0
    %s235 = sadd.s32 %s234, 1
    %s236 = scalar_select %p233, %s234, %s235
    %p239 = pneg %p233
    %p240 = scmp.eq.s32.totalorder %s30, 3
    %p241 = por %p239, %p240
    %p242 = scmp.ne.s32.totalorder %s234, %s237
    %p243 = scmp.eq.s32.totalorder %s30, 0
    %p244 = por %p242, %p243
    %p245 = scmp.ne.s32.totalorder %s234, %s237
    %p246 = scmp.eq.s32.totalorder %s35, 3
    %p247 = por %p245, %p246
    %p248 = scmp.ne.s32.totalorder %s237, %s238
    %p249 = scmp.eq.s32.totalorder %s35, 0
    %p250 = por %p248, %p249
    %p251 = scmp.ne.s32.totalorder %s237, %s238
    %p252 = scmp.eq.s32.totalorder %s36, 3
    %p253 = por %p251, %p252
    %p255 = scmp.ne.s32.totalorder %s238, %s254
    %p256 = scmp.eq.s32.totalorder %s36, 0
    %p257 = por %p255, %p256
    %s258 = ssub.s32 %s38, %s45
    %p259 = scmp.eq.s32.totalorder %s258, 0
    %s261 = sadd.s32 %s260, 1
    %s262 = scalar_select %p259, %s260, %s261
    %p265 = pneg %p259
    %p266 = scmp.eq.s32.totalorder %s30, 3
    %p267 = por %p265, %p266
    %p268 = scmp.ne.s32.totalorder %s260, %s263
    %p269 = scmp.eq.s32.totalorder %s30, 0
    %p270 = por %p268, %p269
    %p271 = scmp.ne.s32.totalorder %s260, %s263
    %p272 = scmp.eq.s32.totalorder %s35, 3
    %p273 = por %p271, %p272
    %p274 = scmp.ne.s32.totalorder %s263, %s264
    %p275 = scmp.eq.s32.totalorder %s35, 0
    %p276 = por %p274, %p275
    %p277 = scmp.ne.s32.totalorder %s263, %s264
    %p278 = scmp.eq.s32.totalorder %s36, 3
    %p279 = por %p277, %p278
    %p281 = scmp.ne.s32.totalorder %s264, %s280
    %p282 = scmp.eq.s32.totalorder %s36, 0
    %p283 = por %p281, %p282
    %s284 = ssub.s32 %s38, %s45
    %p285 = scmp.eq.s32.totalorder %s284, 0
    %s287 = sadd.s32 %s286, 1
    %s288 = scalar_select %p285, %s286, %s287
    %p291 = pneg %p285
    %p292 = scmp.eq.s32.totalorder %s30, 3
    %p293 = por %p291, %p292
    %p294 = scmp.ne.s32.totalorder %s286, %s289
    %p295 = scmp.eq.s32.totalorder %s30, 0
    %p296 = por %p294, %p295
    %p297 = scmp.ne.s32.totalorder %s286, %s289
    %p298 = scmp.eq.s32.totalorder %s35, 3
    %p299 = por %p297, %p298
    %p300 = scmp.ne.s32.totalorder %s289, %s290
    %p301 = scmp.eq.s32.totalorder %s35, 0
    %p302 = por %p300, %p301
    %p303 = scmp.ne.s32.totalorder %s289, %s290
    %p304 = scmp.eq.s32.totalorder %s36, 3
    %p305 = por %p303, %p304
    %p307 = scmp.ne.s32.totalorder %s290, %s306
    %p308 = scmp.eq.s32.totalorder %s36, 0
    %p309 = por %p307, %p308
    %s310 = ssub.s32 %s38, %s45
    %p311 = scmp.eq.s32.totalorder %s310, 0
    %s313 = sadd.s32 %s312, 1
    %s314 = scalar_select %p311, %s312, %s313
    %p317 = pneg %p311
    %p318 = scmp.eq.s32.totalorder %s30, 3
    %p319 = por %p317, %p318
    %p320 = scmp.ne.s32.totalorder %s312, %s315
    %p321 = scmp.eq.s32.totalorder %s30, 0
    %p322 = por %p320, %p321
    %p323 = scmp.ne.s32.totalorder %s312, %s315
    %p324 = scmp.eq.s32.totalorder %s35, 3
    %p325 = por %p323, %p324
    %p326 = scmp.ne.s32.totalorder %s315, %s316
    %p327 = scmp.eq.s32.totalorder %s35, 0
    %p328 = por %p326, %p327
    %p329 = scmp.ne.s32.totalorder %s315, %s316
    %p330 = scmp.eq.s32.totalorder %s36, 3
    %p331 = por %p329, %p330
    %p333 = scmp.ne.s32.totalorder %s316, %s332
    %p334 = scmp.eq.s32.totalorder %s36, 0
    %p335 = por %p333, %p334
    %s336 = ssub.s32 %s38, %s45
    %p337 = scmp.eq.s32.totalorder %s336, 0
    %s339 = sadd.s32 %s338, 1
    %s340 = scalar_select %p337, %s338, %s339
    %p343 = pneg %p337
    %p344 = scmp.eq.s32.totalorder %s30, 3
    %p345 = por %p343, %p344
    %p346 = scmp.ne.s32.totalorder %s338, %s341
    %p347 = scmp.eq.s32.totalorder %s30, 0
    %p348 = por %p346, %p347
    %p349 = scmp.ne.s32.totalorder %s338, %s341
    %p350 = scmp.eq.s32.totalorder %s35, 3
    %p351 = por %p349, %p350
    %p352 = scmp.ne.s32.totalorder %s341, %s342
    %p353 = scmp.eq.s32.totalorder %s35, 0
    %p354 = por %p352, %p353
    %p355 = scmp.ne.s32.totalorder %s341, %s342
    %p356 = scmp.eq.s32.totalorder %s36, 3
    %p357 = por %p355, %p356
    %p359 = scmp.ne.s32.totalorder %s342, %s358
    %p360 = scmp.eq.s32.totalorder %s36, 0
    %p361 = por %p359, %p360
    %s362 = ssub.s32 %s38, %s45
    %p363 = scmp.eq.s32.totalorder %s362, 0
    %s365 = sadd.s32 %s364, 1
    %s366 = scalar_select %p363, %s364, %s365
    %p369 = pneg %p363
    %p370 = scmp.eq.s32.totalorder %s30, 3
    %p371 = por %p369, %p370
    %p372 = scmp.ne.s32.totalorder %s364, %s367
    %p373 = scmp.eq.s32.totalorder %s30, 0
    %p374 = por %p372, %p373
    %p375 = scmp.ne.s32.totalorder %s364, %s367
    %p376 = scmp.eq.s32.totalorder %s35, 3
    %p377 = por %p375, %p376
    %p378 = scmp.ne.s32.totalorder %s367, %s368
    %p379 = scmp.eq.s32.totalorder %s35, 0
    %p380 = por %p378, %p379
    %p381 = scmp.ne.s32.totalorder %s367, %s368
    %p382 = scmp.eq.s32.totalorder %s36, 3
    %p383 = por %p381, %p382
    %p385 = scmp.ne.s32.totalorder %s368, %s384
    %p386 = scmp.eq.s32.totalorder %s36, 0
    %p387 = por %p385, %p386
    %s388 = ssub.s32 %s38, %s45
    %p389 = scmp.eq.s32.totalorder %s388, 0
    %s391 = sadd.s32 %s390, 1
    %s392 = scalar_select %p389, %s390, %s391
    %p395 = pneg %p389
    %p396 = scmp.eq.s32.totalorder %s30, 3
    %p397 = por %p395, %p396
    %p398 = scmp.ne.s32.totalorder %s390, %s393
    %p399 = scmp.eq.s32.totalorder %s30, 0
    %p400 = por %p398, %p399
    %p401 = scmp.ne.s32.totalorder %s390, %s393
    %p402 = scmp.eq.s32.totalorder %s35, 3
    %p403 = por %p401, %p402
    %p404 = scmp.ne.s32.totalorder %s393, %s394
    %p405 = scmp.eq.s32.totalorder %s35, 0
    %p406 = por %p404, %p405
    %p407 = scmp.ne.s32.totalorder %s393, %s394
    %p408 = scmp.eq.s32.totalorder %s36, 3
    %p409 = por %p407, %p408
    %p411 = scmp.ne.s32.totalorder %s394, %s410
    %p412 = scmp.eq.s32.totalorder %s36, 0
    %p413 = por %p411, %p412
    %s415 = sadd.s32 %s414, 1
    %p418 = scmp.eq.s32.totalorder %s30, 3
    %p419 = scmp.ne.s32.totalorder %s414, %s416
    %p420 = scmp.eq.s32.totalorder %s30, 0
    %p421 = por %p419, %p420
    %p422 = scmp.ne.s32.totalorder %s414, %s416
    %p423 = scmp.eq.s32.totalorder %s35, 3
    %p424 = por %p422, %p423
    %p425 = scmp.ne.s32.totalorder %s416, %s417
    %p426 = scmp.eq.s32.totalorder %s35, 0
    %p427 = por %p425, %p426
    %p428 = scmp.ne.s32.totalorder %s416, %s417
    %p429 = scmp.eq.s32.totalorder %s36, 3
    %p430 = por %p428, %p429
    %p432 = scmp.ne.s32.totalorder %s417, %s431
    %p433 = scmp.eq.s32.totalorder %s36, 0
    %p434 = por %p432, %p433
    %s436 = sadd.s32 %s435, 1
    %p439 = scmp.eq.s32.totalorder %s30, 3
    %p440 = scmp.ne.s32.totalorder %s435, %s437
    %p441 = scmp.eq.s32.totalorder %s30, 0
    %p442 = por %p440, %p441
    %p443 = scmp.ne.s32.totalorder %s435, %s437
    %p444 = scmp.eq.s32.totalorder %s35, 3
    %p445 = por %p443, %p444
    %p446 = scmp.ne.s32.totalorder %s437, %s438
    %p447 = scmp.eq.s32.totalorder %s35, 0
    %p448 = por %p446, %p447
    %p449 = scmp.ne.s32.totalorder %s437, %s438
    %p450 = scmp.eq.s32.totalorder %s36, 3
    %p451 = por %p449, %p450
    %p453 = scmp.ne.s32.totalorder %s438, %s452
    %p454 = scmp.eq.s32.totalorder %s36, 0
    %p455 = por %p453, %p454
    %s457 = sadd.s32 %s456, 1
    %p460 = scmp.eq.s32.totalorder %s30, 3
    %p461 = scmp.ne.s32.totalorder %s456, %s458
    %p462 = scmp.eq.s32.totalorder %s30, 0
    %p463 = por %p461, %p462
    %p464 = scmp.ne.s32.totalorder %s456, %s458
    %p465 = scmp.eq.s32.totalorder %s35, 3
    %p466 = por %p464, %p465
    %p467 = scmp.ne.s32.totalorder %s458, %s459
    %p468 = scmp.eq.s32.totalorder %s35, 0
    %p469 = por %p467, %p468
    %p470 = scmp.ne.s32.totalorder %s458, %s459
    %p471 = scmp.eq.s32.totalorder %s36, 3
    %p472 = por %p470, %p471
    %p474 = scmp.ne.s32.totalorder %s459, %s473
    %p475 = scmp.eq.s32.totalorder %s36, 0
    %p476 = por %p474, %p475
    %s477 = ssub.s32 %s37, %s49
    %p478 = scmp.eq.s32.totalorder %s477, 0
    %s480 = sadd.s32 %s479, 1
    %s481 = scalar_select %p478, %s479, %s480
    %p484 = pneg %p478
    %p485 = scmp.eq.s32.totalorder %s30, 3
    %p486 = por %p484, %p485
    %p487 = scmp.ne.s32.totalorder %s479, %s482
    %p488 = scmp.eq.s32.totalorder %s30, 0
    %p489 = por %p487, %p488
    %p490 = scmp.ne.s32.totalorder %s479, %s482
    %p491 = scmp.eq.s32.totalorder %s35, 3
    %p492 = por %p490, %p491
    %p493 = scmp.ne.s32.totalorder %s482, %s483
    %p494 = scmp.eq.s32.totalorder %s35, 0
    %p495 = por %p493, %p494
    %p496 = scmp.ne.s32.totalorder %s482, %s483
    %p497 = scmp.eq.s32.totalorder %s36, 3
    %p498 = por %p496, %p497
    %p500 = scmp.ne.s32.totalorder %s483, %s499
    %p501 = scmp.eq.s32.totalorder %s36, 0
    %p502 = por %p500, %p501
    %p503 = scmp.le.s32.totalorder 1, %s30
    %p504 = scmp.lt.s32.totalorder %s30, 5
    %p505 = pnand %p503, %p504
    %p506 = pneg %p505
    // Predicated region
    $region9: #{gpt2_merged_forward.1} parent=5 // pred_check
      _
    $region10: #{gpt2_merged_forward.1} parent=5 // pred_check_branch
      %508 = sbr.rel (%p505) target = $region12
    $region11: #{gpt2_merged_forward.1} parent=5 // pred_region
      %s509 = ssub.s32 %s30, 1
      // Predicated region
      $region13: #{gpt2_merged_forward.1} parent=11 // pred_check
        %p510 = pneg %p427
      $region14: #{gpt2_merged_forward.1} parent=11 // pred_check_branch
        %512 = sbr.rel (%p510) target = $region16
      $region15: #{gpt2_merged_forward.1} parent=11 // pred_region
        _
      $region16: #{gpt2_merged_forward.1} parent=11 // pred_fallthru
        _
      // Predicated region
      $region17: #{gpt2_merged_forward.1} parent=11 // pred_check
        %p513 = pneg %p448
      $region18: #{gpt2_merged_forward.1} parent=11 // pred_check_branch
        %515 = sbr.rel (%p513) target = $region20
      $region19: #{gpt2_merged_forward.1} parent=11 // pred_region
        _
      $region20: #{gpt2_merged_forward.1} parent=11 // pred_fallthru
        _
      // Predicated region
      $region21: #{gpt2_merged_forward.1} parent=11 // pred_check
        %p516 = pneg %p469
      $region22: #{gpt2_merged_forward.1} parent=11 // pred_check_branch
        %518 = sbr.rel (%p516) target = $region24
      $region23: #{gpt2_merged_forward.1} parent=11 // pred_region
        _
      $region24: #{gpt2_merged_forward.1} parent=11 // pred_fallthru
        _
    $region12: #{gpt2_merged_forward.1} parent=5 // pred_fallthru
      _
    %p519 = scmp.lt.s32.totalorder %s30, 4
    // Predicated region
    $region25: #{gpt2_merged_forward.1} parent=5 // pred_check
      %p520 = pneg %p519
    $region26: #{gpt2_merged_forward.1} parent=5 // pred_check_branch
      %522 = sbr.rel (%p520) target = $region28
    $region27: #{gpt2_merged_forward.1} parent=5 // pred_region
      // Predicated region
      $region29: #{gpt2_merged_forward.1} parent=27 // pred_check
        %p523 = pneg %p62
      $region30: #{gpt2_merged_forward.1} parent=27 // pred_check_branch
        %525 = sbr.rel (%p523) target = $region32
      $region31: #{gpt2_merged_forward.1} parent=27 // pred_region
        %p526 = scmp.lt.s32.totalorder %s37, 1
        %s527 = scalar_select %p526, %s37, 1
        %s528 = smul.addr %s527, 8
        %s529 = scalar_lea.vmem %s1, %s528
      $region32: #{gpt2_merged_forward.1} parent=27 // pred_fallthru
        _
      // Predicated region
      $region33: #{gpt2_merged_forward.1} parent=27 // pred_check
        %p530 = pneg %p88
      $region34: #{gpt2_merged_forward.1} parent=27 // pred_check_branch
        %532 = sbr.rel (%p530) target = $region36
      $region35: #{gpt2_merged_forward.1} parent=27 // pred_region
        %p533 = scmp.lt.s32.totalorder %s37, 1
        %s534 = scalar_select %p533, %s37, 1
        %s535 = scalar_lea.vmem %s2, %s534
      $region36: #{gpt2_merged_forward.1} parent=27 // pred_fallthru
        _
      // Predicated region
      $region37: #{gpt2_merged_forward.1} parent=27 // pred_check
        %p536 = pneg %p114
      $region38: #{gpt2_merged_forward.1} parent=27 // pred_check_branch
        %538 = sbr.rel (%p536) target = $region40
      $region39: #{gpt2_merged_forward.1} parent=27 // pred_region
        %p539 = scmp.lt.s32.totalorder %s38, 1
        %s540 = scalar_select %p539, %s38, 1
        %s541 = scalar_lea.vmem %s3, %s540
      $region40: #{gpt2_merged_forward.1} parent=27 // pred_fallthru
        _
      // Predicated region
      $region41: #{gpt2_merged_forward.1} parent=27 // pred_check
        %p542 = pneg %p140
      $region42: #{gpt2_merged_forward.1} parent=27 // pred_check_branch
        %544 = sbr.rel (%p542) target = $region44
      $region43: #{gpt2_merged_forward.1} parent=27 // pred_region
        %p545 = scmp.lt.s32.totalorder %s38, 1
        %s546 = scalar_select %p545, %s38, 1
        %s547 = scalar_lea.vmem %s4, %s546
      $region44: #{gpt2_merged_forward.1} parent=27 // pred_fallthru
        _
      // Predicated region
      $region45: #{gpt2_merged_forward.1} parent=27 // pred_check
        %p548 = pneg %p166
      $region46: #{gpt2_merged_forward.1} parent=27 // pred_check_branch
        %550 = sbr.rel (%p548) target = $region48
      $region47: #{gpt2_merged_forward.1} parent=27 // pred_region
        %p551 = scmp.lt.s32.totalorder %s38, 1
        %s552 = scalar_select %p551, %s38, 1
        %s553 = smul.addr %s552, 4
        %s554 = smul.addr %s553, 4
        %s555 = scalar_lea.vmem %s5, %s554
      $region48: #{gpt2_merged_forward.1} parent=27 // pred_fallthru
        _
      // Predicated region
      $region49: #{gpt2_merged_forward.1} parent=27 // pred_check
        %p556 = pneg %p192
      $region50: #{gpt2_merged_forward.1} parent=27 // pred_check_branch
        %558 = sbr.rel (%p556) target = $region52
      $region51: #{gpt2_merged_forward.1} parent=27 // pred_region
        %p559 = scmp.lt.s32.totalorder %s38, 1
        %s560 = scalar_select %p559, %s38, 1
        %s561 = scalar_lea.vmem %s6, %s560
      $region52: #{gpt2_merged_forward.1} parent=27 // pred_fallthru
        _
      // Predicated region
      $region53: #{gpt2_merged_forward.1} parent=27 // pred_check
        %p562 = pneg %p218
      $region54: #{gpt2_merged_forward.1} parent=27 // pred_check_branch
        %564 = sbr.rel (%p562) target = $region56
      $region55: #{gpt2_merged_forward.1} parent=27 // pred_region
        %p565 = scmp.lt.s32.totalorder %s38, 1
        %s566 = scalar_select %p565, %s38, 1
        %s567 = smul.addr %s566, 4
        %s568 = smul.addr %s567, 4
        %s569 = scalar_lea.vmem %s7, %s568
      $region56: #{gpt2_merged_forward.1} parent=27 // pred_fallthru
        _
      // Predicated region
      $region57: #{gpt2_merged_forward.1} parent=27 // pred_check
        %p570 = pneg %p244
      $region58: #{gpt2_merged_forward.1} parent=27 // pred_check_branch
        %572 = sbr.rel (%p570) target = $region60
      $region59: #{gpt2_merged_forward.1} parent=27 // pred_region
        %p573 = scmp.lt.s32.totalorder %s38, 1
        %s574 = scalar_select %p573, %s38, 1
        %s575 = scalar_lea.vmem %s8, %s574
      $region60: #{gpt2_merged_forward.1} parent=27 // pred_fallthru
        _
      // Predicated region
      $region61: #{gpt2_merged_forward.1} parent=27 // pred_check
        %p576 = pneg %p270
      $region62: #{gpt2_merged_forward.1} parent=27 // pred_check_branch
        %578 = sbr.rel (%p576) target = $region64
      $region63: #{gpt2_merged_forward.1} parent=27 // pred_region
        %p579 = scmp.lt.s32.totalorder %s38, 1
        %s580 = scalar_select %p579, %s38, 1
        %s581 = scalar_lea.vmem %s9, %s580
      $region64: #{gpt2_merged_forward.1} parent=27 // pred_fallthru
        _
      // Predicated region
      $region65: #{gpt2_merged_forward.1} parent=27 // pred_check
        %p582 = pneg %p296
      $region66: #{gpt2_merged_forward.1} parent=27 // pred_check_branch
        %584 = sbr.rel (%p582) target = $region68
      $region67: #{gpt2_merged_forward.1} parent=27 // pred_region
        %p585 = scmp.lt.s32.totalorder %s38, 1
        %s586 = scalar_select %p585, %s38, 1
        %s587 = scalar_lea.vmem %s10, %s586
      $region68: #{gpt2_merged_forward.1} parent=27 // pred_fallthru
        _
      // Predicated region
      $region69: #{gpt2_merged_forward.1} parent=27 // pred_check
        %p588 = pneg %p322
      $region70: #{gpt2_merged_forward.1} parent=27 // pred_check_branch
        %590 = sbr.rel (%p588) target = $region72
      $region71: #{gpt2_merged_forward.1} parent=27 // pred_region
        %p591 = scmp.lt.s32.totalorder %s38, 1
        %s592 = scalar_select %p591, %s38, 1
        %s593 = smul.addr %s592, 4
        %s594 = smul.addr %s593, 4
        %s595 = scalar_lea.vmem %s11, %s594
      $region72: #{gpt2_merged_forward.1} parent=27 // pred_fallthru
        _
      // Predicated region
      $region73: #{gpt2_merged_forward.1} parent=27 // pred_check
        %p596 = pneg %p348
      $region74: #{gpt2_merged_forward.1} parent=27 // pred_check_branch
        %598 = sbr.rel (%p596) target = $region76
      $region75: #{gpt2_merged_forward.1} parent=27 // pred_region
        %p599 = scmp.lt.s32.totalorder %s38, 1
        %s600 = scalar_select %p599, %s38, 1
        %s601 = scalar_lea.vmem %s12, %s600
      $region76: #{gpt2_merged_forward.1} parent=27 // pred_fallthru
        _
      // Predicated region
      $region77: #{gpt2_merged_forward.1} parent=27 // pred_check
        %p602 = pneg %p374
      $region78: #{gpt2_merged_forward.1} parent=27 // pred_check_branch
        %604 = sbr.rel (%p602) target = $region80
      $region79: #{gpt2_merged_forward.1} parent=27 // pred_region
        %p605 = scmp.lt.s32.totalorder %s38, 1
        %s606 = scalar_select %p605, %s38, 1
        %s607 = smul.addr %s606, 16
        %s608 = smul.addr %s607, 4
        %s609 = scalar_lea.vmem %s13, %s608
      $region80: #{gpt2_merged_forward.1} parent=27 // pred_fallthru
        _
      // Predicated region
      $region81: #{gpt2_merged_forward.1} parent=27 // pred_check
        %p610 = pneg %p400
      $region82: #{gpt2_merged_forward.1} parent=27 // pred_check_branch
        %612 = sbr.rel (%p610) target = $region84
      $region83: #{gpt2_merged_forward.1} parent=27 // pred_region
        %p613 = scmp.lt.s32.totalorder %s38, 1
        %s614 = scalar_select %p613, %s38, 1
        %s615 = scalar_lea.vmem %s14, %s614
      $region84: #{gpt2_merged_forward.1} parent=27 // pred_fallthru
        _
    $region28: #{gpt2_merged_forward.1} parent=5 // pred_fallthru
      _
    %p616 = scmp.le.s32.totalorder 1, %s30
    %p617 = scmp.lt.s32.totalorder %s30, 5
    %p618 = pnand %p616, %p617
    %p619 = pneg %p618
    // Predicated region
    $region85: #{gpt2_merged_forward.1} parent=5 // pred_check
      _
    $region86: #{gpt2_merged_forward.1} parent=5 // pred_check_branch
      %621 = sbr.rel (%p618) target = $region88
    $region87: #{gpt2_merged_forward.1} parent=5 // pred_region
      %s622 = ssub.s32 %s30, 1
      %p623 = scmp.lt.s32.totalorder %s39, 1
      %s624 = scalar_select %p623, %s39, 1
      %s625 = smul.addr %s624, 8
      %s626 = scalar_lea.vmem %s1, %s625
      %p627 = pneg %p68
      %p628 = pneg %p65
      %p629 = scmp.lt.s32.totalorder %s39, 1
      %s630 = scalar_select %p629, %s39, 1
      %s631 = scalar_lea.vmem %s2, %s630
      %p632 = pneg %p94
      %p633 = pneg %p91
      %p634 = scmp.lt.s32.totalorder %s40, 1
      %s635 = scalar_select %p634, %s40, 1
      %s636 = scalar_lea.vmem %s3, %s635
      %p637 = pneg %p120
      %p638 = pneg %p117
      %p639 = scmp.lt.s32.totalorder %s40, 1
      %s640 = scalar_select %p639, %s40, 1
      %s641 = scalar_lea.vmem %s4, %s640
      %p642 = pneg %p146
      %p643 = pneg %p143
      %p644 = scmp.lt.s32.totalorder %s40, 1
      %s645 = scalar_select %p644, %s40, 1
      %s646 = smul.addr %s645, 4
      %s647 = smul.addr %s646, 4
      %s648 = scalar_lea.vmem %s5, %s647
      %p649 = pneg %p172
      %p650 = pneg %p169
      %p651 = scmp.lt.s32.totalorder %s40, 1
      %s652 = scalar_select %p651, %s40, 1
      %s653 = scalar_lea.vmem %s6, %s652
      %p654 = pneg %p198
      %p655 = pneg %p195
      %p656 = scmp.lt.s32.totalorder %s40, 1
      %s657 = scalar_select %p656, %s40, 1
      %s658 = smul.addr %s657, 4
      %s659 = smul.addr %s658, 4
      %s660 = scalar_lea.vmem %s7, %s659
      %p661 = pneg %p224
      %p662 = pneg %p221
      %p663 = scmp.lt.s32.totalorder %s40, 1
      %s664 = scalar_select %p663, %s40, 1
      %s665 = scalar_lea.vmem %s8, %s664
      %p666 = pneg %p250
      %p667 = pneg %p247
      %p668 = scmp.lt.s32.totalorder %s40, 1
      %s669 = scalar_select %p668, %s40, 1
      %s670 = scalar_lea.vmem %s9, %s669
      %p671 = pneg %p276
      %p672 = pneg %p273
      %p673 = scmp.lt.s32.totalorder %s40, 1
      %s674 = scalar_select %p673, %s40, 1
      %s675 = scalar_lea.vmem %s10, %s674
      %p676 = pneg %p302
      %p677 = pneg %p299
      %p678 = scmp.lt.s32.totalorder %s40, 1
      %s679 = scalar_select %p678, %s40, 1
      %s680 = smul.addr %s679, 4
      %s681 = smul.addr %s680, 4
      %s682 = scalar_lea.vmem %s11, %s681
      %p683 = pneg %p328
      %p684 = pneg %p325
      %p685 = scmp.lt.s32.totalorder %s40, 1
      %s686 = scalar_select %p685, %s40, 1
      %s687 = scalar_lea.vmem %s12, %s686
      %p688 = pneg %p354
      %p689 = pneg %p351
      %p690 = scmp.lt.s32.totalorder %s40, 1
      %s691 = scalar_select %p690, %s40, 1
      %s692 = smul.addr %s691, 16
      %s693 = smul.addr %s692, 4
      %s694 = scalar_lea.vmem %s13, %s693
      %p695 = pneg %p380
      %p696 = pneg %p377
      %p697 = scmp.lt.s32.totalorder %s40, 1
      %s698 = scalar_select %p697, %s40, 1
      %s699 = scalar_lea.vmem %s14, %s698
      %p700 = pneg %p406
      %p701 = pneg %p403
      %p702 = pneg %p427
      %p703 = pneg %p424
      %p704 = pneg %p448
      %p705 = pneg %p445
      %p706 = pneg %p469
      %p707 = pneg %p466
      %p708 = pneg %p495
      %p709 = pneg %p492
      %p710 = scmp.lt.s32.totalorder %s39, 1
      %s711 = scalar_select %p710, %s39, 1
      %s712 = scalar_lea.vmem %s18, %s711
      %p713 = scmp.lt.s32.totalorder %s39, 1
      %s714 = scalar_select %p713, %s39, 1
      %s715 = smul.addr %s714, 8
      %s716 = scalar_lea.vmem %s1, %s715
      %p717 = scmp.lt.s32.totalorder %s39, 1
      %s718 = scalar_select %p717, %s39, 1
      %s719 = scalar_lea.vmem %s2, %s718
      %p720 = scmp.lt.s32.totalorder %s40, 1
      %s721 = scalar_select %p720, %s40, 1
      %s722 = scalar_lea.vmem %s3, %s721
      %p723 = scmp.lt.s32.totalorder %s40, 1
      %s724 = scalar_select %p723, %s40, 1
      %s725 = scalar_lea.vmem %s4, %s724
      %p726 = scmp.lt.s32.totalorder %s40, 1
      %s727 = scalar_select %p726, %s40, 1
      %s728 = smul.addr %s727, 4
      %s729 = smul.addr %s728, 4
      %s730 = scalar_lea.vmem %s5, %s729
      %p731 = scmp.lt.s32.totalorder %s40, 1
      %s732 = scalar_select %p731, %s40, 1
      %s733 = scalar_lea.vmem %s6, %s732
      %p734 = scmp.lt.s32.totalorder %s40, 1
      %s735 = scalar_select %p734, %s40, 1
      %s736 = smul.addr %s735, 4
      %s737 = smul.addr %s736, 4
      %s738 = scalar_lea.vmem %s7, %s737
      %p739 = scmp.lt.s32.totalorder %s40, 1
      %s740 = scalar_select %p739, %s40, 1
      %s741 = scalar_lea.vmem %s8, %s740
      %p742 = scmp.lt.s32.totalorder %s40, 1
      %s743 = scalar_select %p742, %s40, 1
      %s744 = scalar_lea.vmem %s9, %s743
      %p745 = scmp.lt.s32.totalorder %s40, 1
      %s746 = scalar_select %p745, %s40, 1
      %s747 = scalar_lea.vmem %s10, %s746
      %p748 = scmp.lt.s32.totalorder %s40, 1
      %s749 = scalar_select %p748, %s40, 1
      %s750 = smul.addr %s749, 4
      %s751 = smul.addr %s750, 4
      %s752 = scalar_lea.vmem %s11, %s751
      %p753 = scmp.lt.s32.totalorder %s40, 1
      %s754 = scalar_select %p753, %s40, 1
      %s755 = scalar_lea.vmem %s12, %s754
      %p756 = scmp.lt.s32.totalorder %s40, 1
      %s757 = scalar_select %p756, %s40, 1
      %s758 = smul.addr %s757, 16
      %s759 = smul.addr %s758, 4
      %s760 = scalar_lea.vmem %s13, %s759
      %p761 = scmp.lt.s32.totalorder %s40, 1
      %s762 = scalar_select %p761, %s40, 1
      %s763 = scalar_lea.vmem %s14, %s762
      %p764 = scmp.lt.s32.totalorder %s39, 1
      %s765 = scalar_select %p764, %s39, 1
      %s766 = scalar_lea.vmem %s18, %s765
      %p768 = scmp.eq.s32.totalorder %s40, 0
      // Predicated region
      $region89: #{gpt2_merged_forward.1} parent=87 // pred_check
        %p769 = pneg %p768
      $region90: #{gpt2_merged_forward.1} parent=87 // pred_check_branch
        %771 = sbr.rel (%p769) target = $region92
      $region91: #{gpt2_merged_forward.1} parent=87 // pred_region
        %v772 = vld [vmem:[%s716] sm:$0xff]
        %vm773 = vcmask 261120
        %774 = vst.msk [vmem:[#allocation2] sm:$0xff] %vm773, %v772
      $region92: #{gpt2_merged_forward.1} parent=87 // pred_fallthru
        _
      %v775 = vld [vmem:[#allocation2] sm:$0xff]
      %vm776 = vcmask 261120
      %v777 = vsel %vm776, %v775, 0.0
      %778 = vadd.xlane.f32.xlu0 %v777
      %v779 = vpop.xlane.xlu0 %778
      %v780 = vrcp.pop 32.0
      %v781 = vmul.f32 %v779, %v780
      %v782 = vsub.f32 %v775, %v781
      %v783 = vmul.f32 %v782, %v782
      %v784 = vsel %vm776, %v783, 0.0
      %785 = vadd.xlane.f32.xlu0 %v784
      %v786 = vpop.xlane.xlu0 %785
      %v787 = vmul.f32 %v786, %v780
      %v788 = vadd.f32 %v787, 1e-05
      %v789 = vrsqrt.pop %v788
      %v790 = vmul.f32 %v782, %v789
      %v791 = vld [vmem:[%s722] sm:$0x1]
      %v793 = vlaneseq
      %v794 = vshrl.u32 %v793, 7
      %v795 = vsub.s32 0, %v794
      %v796 = vrot.slane %v791, %v795
      %v798 = vmul.f32 %v790, %v796
      %v799 = vld [vmem:[%s725] sm:$0x1]
      %v801 = vlaneseq
      %v802 = vshrl.u32 %v801, 7
      %v803 = vsub.s32 0, %v802
      %v804 = vrot.slane %v799, %v803
      %v806 = vadd.f32 %v798, %v804
      %v807 = vpack.c.bf16 %v806, %v806
      %v808 = vld [vmem:[%s730] sm:$0xf]
      %v809 = vld [vmem:[%s730 + $0x4] sm:$0xf]
      %v810 = vld [vmem:[%s730 + $0x8] sm:$0xf]
      %v811 = vld [vmem:[%s730 + $0xc] sm:$0xf]
      %v812 = vld [vmem:[%s733] sm:$0x1]
      %v814 = vlaneseq
      %v815 = vshrl.u32 %v814, 7
      %v816 = vsub.s32 0, %v815
      %v817 = vrot.slane %v812, %v816
      %v823 = vunpack.c.l.b16 %v808
      %v824 = vunpack.c.l.b16 %v809
      %v825 = vunpack.c.l.b16 %v810
      %v826 = vunpack.c.l.b16 %v811
      %v827 = vpack.c.b16 %v824, %v823
      %v828 = vpack.c.b16 %v826, %v825
      %v832 = vsel %vm776, %v807, 0
      %834 = vmatprep.subr.bf16.mxu0 0
      %835 = vmatpush1.bf16.msra.mxu0 0
      %836 = vmatprep.subr.bf16.mxu0 0
      %837 = vmatpush1.bf16.msra.mxu0 0
      %838 = vmatprep.subr.bf16.mxu0 0
      %839 = vmatpush1.bf16.msra.mxu0 0
      %840 = vmatprep.subr.bf16.mxu0 0
      %841 = vmatpush1.bf16.msra.mxu0 0
      %842 = vmatprep.subr.bf16.mxu0 0
      %843 = vmatpush1.bf16.msra.mxu0 0
      %844 = vmatprep.subr.bf16.mxu0 0
      %845 = vmatpush1.bf16.msra.mxu0 0
      %846 = vmatprep.subr.bf16.mxu0 0
      %847 = vmatpush1.bf16.msra.mxu0 %v828
      %848 = vmatprep.subr.bf16.mxu0 0
      %849 = vmatpush1.bf16.msra.mxu0 %v827
      %850 = vmatprep.subr.bf16.mxu0 0
      %851 = vmatpush2.bf16.msra.mxu0 0
      %852 = vmatprep.subr.bf16.mxu0 0
      %853 = vmatpush2.bf16.msra.mxu0 0
      %854 = vmatprep.subr.bf16.mxu0 0
      %855 = vmatpush2.bf16.msra.mxu0 0
      %856 = vmatprep.subr.bf16.mxu0 0
      %857 = vmatpush2.bf16.msra.mxu0 0
      %858 = vmatprep.subr.bf16.mxu0 0
      %859 = vmatpush2.bf16.msra.mxu0 0
      %860 = vmatprep.subr.bf16.mxu0 0
      %861 = vmatpush2.bf16.msra.mxu0 0
      %862 = vmatprep.subr.bf16.mxu0 0
      %863 = vmatpush2.bf16.msra.mxu0 0
      %864 = vmatprep.subr.bf16.mxu0 0
      %865 = vmatpush2.bf16.msra.mxu0 0
      %866 = vmatprep.mubr.bf16.mxu0 0
      %867 = vmatmul.mubr.bf16.gmra.mxu0 %v832
      %v868 = vpop.f32.mrf.mxu0
      %v869 = vadd.f32 %v817, %v868
      %v870 = vpop.f32.mrf.mxu0
      %v871 = vpop.f32.mrf.mxu0
      %v872 = vpop.f32.mrf.mxu0
      %873 = vdwg.mxu0
      %v874 = vlaneseq
      %v875 = vshrl.u32 %v874, 7
      %v876 = vlaneseq
      %v877 = vand.u32 %v876, 127
      %vm878 = vcmp.le.s32.totalorder %v877, %v875
      %v879 = vsel %vm878, 0.0, -1e+09
      %v880 = vld [vmem:[%s719] sm:$0x1]
      %v882 = vlaneseq
      %v883 = vshrl.u32 %v882, 7
      %v884 = vsub.s32 0, %v883
      %v885 = vrot.slane %v880, %v884
      %v887 = vadd.f32 %v879, %v885
      %v888 = vpack.c.bf16 %v869, %v869
      %890 = vrot.lane.b32.xlu0 %v888, 96
      %v891 = vpop.permute.xlu0 %890
      %vm892 = vcmask 130048
      %v894 = vsel %vm892, %v888, 0
      %v897 = vsel %vm892, %v891, 0
      %899 = vmatprep.subr.bf16.mxu0 0
      %900 = vmatpush1.bf16.xpose.msra.mxu0 0
      %901 = vmatprep.subr.bf16.mxu0 0
      %902 = vmatpush1.bf16.xpose.msra.mxu0 0
      %903 = vmatprep.subr.bf16.mxu0 0
      %904 = vmatpush1.bf16.xpose.msra.mxu0 0
      %905 = vmatprep.subr.bf16.mxu0 0
      %906 = vmatpush1.bf16.xpose.msra.mxu0 0
      %907 = vmatprep.subr.bf16.mxu0 0
      %908 = vmatpush1.bf16.xpose.msra.mxu0 0
      %909 = vmatprep.subr.bf16.mxu0 0
      %910 = vmatpush1.bf16.xpose.msra.mxu0 0
      %911 = vmatprep.subr.bf16.mxu0 0
      %912 = vmatpush1.bf16.xpose.msra.mxu0 0
      %913 = vmatprep.subr.bf16.mxu0 0
      %914 = vmatpush1.bf16.xpose.msra.mxu0 %v897
      %915 = vmatprep.subr.bf16.mxu0 0
      %916 = vmatpush2.bf16.xpose.msra.mxu0 0
      %917 = vmatprep.subr.bf16.mxu0 0
      %918 = vmatpush2.bf16.xpose.msra.mxu0 0
      %919 = vmatprep.subr.bf16.mxu0 0
      %920 = vmatpush2.bf16.xpose.msra.mxu0 0
      %921 = vmatprep.subr.bf16.mxu0 0
      %922 = vmatpush2.bf16.xpose.msra.mxu0 0
      %923 = vmatprep.subr.bf16.mxu0 0
      %924 = vmatpush2.bf16.xpose.msra.mxu0 0
      %925 = vmatprep.subr.bf16.mxu0 0
      %926 = vmatpush2.bf16.xpose.msra.mxu0 0
      %927 = vmatprep.subr.bf16.mxu0 0
      %928 = vmatpush2.bf16.xpose.msra.mxu0 0
      %929 = vmatprep.subr.bf16.mxu0 0
      %930 = vmatpush2.bf16.xpose.msra.mxu0 0
      %931 = vmatprep.mubr.bf16.mxu0 0
      %932 = vmatmul.mubr.bf16.gmra.mxu0 %v894
      %v933 = vpop.f32.mrf.mxu0
      %v934 = vadd.f32 0.0, %v933
      %v935 = vpop.f32.mrf.mxu0
      %v936 = vpop.f32.mrf.mxu0
      %v937 = vpop.f32.mrf.mxu0
      %938 = vdwg.mxu0
      %v939 = vmul.f32 %v934, 0.25
      %v940 = vadd.f32 %v939, %v887
      %vm941 = vcmask 64512
      %v942 = vsel %vm941, %v940, -inf
      %943 = vmax.xlane.f32.xlu0 %v942
      %v944 = vpop.xlane.xlu0 %943
      %v945 = vsub.f32 %v940, %v944
      %v946 = vmul.f32 %v945, 1.442695
      %v947 = vpow.pop %v946
      %v948 = vsel %vm941, %v947, 0.0
      %949 = vadd.xlane.f32.xlu0 %v948
      %v950 = vpop.xlane.xlu0 %949
      %v951 = vrcp.pop %v950
      %v952 = vmul.f32 %v947, %v951
      %v953 = vpack.c.bf16 %v952, %v952
      %954 = vrot.lane.b32.xlu0 %v888, 64
      %v955 = vpop.permute.xlu0 %954
      %v957 = vsel %vm941, %v953, 0
      %vm959 = vcmask 1043456
      %v961 = vsel %vm959, %v955, 0
      %963 = vmatprep.subr.bf16.mxu0 0
      %964 = vmatpush1.bf16.msra.mxu0 0
      %965 = vmatprep.subr.bf16.mxu0 0
      %966 = vmatpush1.bf16.msra.mxu0 0
      %967 = vmatprep.subr.bf16.mxu0 0
      %968 = vmatpush1.bf16.msra.mxu0 0
      %969 = vmatprep.subr.bf16.mxu0 0
      %970 = vmatpush1.bf16.msra.mxu0 0
      %971 = vmatprep.subr.bf16.mxu0 0
      %972 = vmatpush1.bf16.msra.mxu0 0
      %973 = vmatprep.subr.bf16.mxu0 0
      %974 = vmatpush1.bf16.msra.mxu0 0
      %975 = vmatprep.subr.bf16.mxu0 0
      %976 = vmatpush1.bf16.msra.mxu0 0
      %977 = vmatprep.subr.bf16.mxu0 0
      %978 = vmatpush1.bf16.msra.mxu0 %v961
      %979 = vmatprep.subr.bf16.mxu0 0
      %980 = vmatpush2.bf16.msra.mxu0 0
      %981 = vmatprep.subr.bf16.mxu0 0
      %982 = vmatpush2.bf16.msra.mxu0 0
      %983 = vmatprep.subr.bf16.mxu0 0
      %984 = vmatpush2.bf16.msra.mxu0 0
      %985 = vmatprep.subr.bf16.mxu0 0
      %986 = vmatpush2.bf16.msra.mxu0 0
      %987 = vmatprep.subr.bf16.mxu0 0
      %988 = vmatpush2.bf16.msra.mxu0 0
      %989 = vmatprep.subr.bf16.mxu0 0
      %990 = vmatpush2.bf16.msra.mxu0 0
      %991 = vmatprep.subr.bf16.mxu0 0
      %992 = vmatpush2.bf16.msra.mxu0 0
      %993 = vmatprep.subr.bf16.mxu0 0
      %994 = vmatpush2.bf16.msra.mxu0 0
      %995 = vmatprep.mubr.bf16.mxu0 0
      %996 = vmatmul.mubr.bf16.gmra.mxu0 %v957
      %v997 = vpop.f32.mrf.mxu0
      %v998 = vadd.f32 0.0, %v997
      %v999 = vpop.f32.mrf.mxu0
      %v1000 = vpop.f32.mrf.mxu0
      %v1001 = vpop.f32.mrf.mxu0
      %1002 = vdwg.mxu0
      %1003 = vrot.lane.b32.xlu0 %v888, 112
      %v1004 = vpop.permute.xlu0 %1003
      %1005 = vrot.lane.b32.xlu0 %v888, 80
      %v1006 = vpop.permute.xlu0 %1005
      %v1008 = vsel %vm892, %v1004, 0
      %v1011 = vsel %vm892, %v1006, 0
      %1013 = vmatprep.subr.bf16.mxu0 0
      %1014 = vmatpush1.bf16.xpose.msra.mxu0 0
      %1015 = vmatprep.subr.bf16.mxu0 0
      %1016 = vmatpush1.bf16.xpose.msra.mxu0 0
      %1017 = vmatprep.subr.bf16.mxu0 0
      %1018 = vmatpush1.bf16.xpose.msra.mxu0 0
      %1019 = vmatprep.subr.bf16.mxu0 0
      %1020 = vmatpush1.bf16.xpose.msra.mxu0 0
      %1021 = vmatprep.subr.bf16.mxu0 0
      %1022 = vmatpush1.bf16.xpose.msra.mxu0 0
      %1023 = vmatprep.subr.bf16.mxu0 0
      %1024 = vmatpush1.bf16.xpose.msra.mxu0 0
      %1025 = vmatprep.subr.bf16.mxu0 0
      %1026 = vmatpush1.bf16.xpose.msra.mxu0 0
      %1027 = vmatprep.subr.bf16.mxu0 0
      %1028 = vmatpush1.bf16.xpose.msra.mxu0 %v1011
      %1029 = vmatprep.subr.bf16.mxu0 0
      %1030 = vmatpush2.bf16.xpose.msra.mxu0 0
      %1031 = vmatprep.subr.bf16.mxu0 0
      %1032 = vmatpush2.bf16.xpose.msra.mxu0 0
      %1033 = vmatprep.subr.bf16.mxu0 0
      %1034 = vmatpush2.bf16.xpose.msra.mxu0 0
      %1035 = vmatprep.subr.bf16.mxu0 0
      %1036 = vmatpush2.bf16.xpose.msra.mxu0 0
      %1037 = vmatprep.subr.bf16.mxu0 0
      %1038 = vmatpush2.bf16.xpose.msra.mxu0 0
      %1039 = vmatprep.subr.bf16.mxu0 0
      %1040 = vmatpush2.bf16.xpose.msra.mxu0 0
      %1041 = vmatprep.subr.bf16.mxu0 0
      %1042 = vmatpush2.bf16.xpose.msra.mxu0 0
      %1043 = vmatprep.subr.bf16.mxu0 0
      %1044 = vmatpush2.bf16.xpose.msra.mxu0 0
      %1045 = vmatprep.mubr.bf16.mxu0 0
      %1046 = vmatmul.mubr.bf16.gmra.mxu0 %v1008
      %v1047 = vpop.f32.mrf.mxu0
      %v1048 = vadd.f32 0.0, %v1047
      %v1049 = vpop.f32.mrf.mxu0
      %v1050 = vpop.f32.mrf.mxu0
      %v1051 = vpop.f32.mrf.mxu0
      %1052 = vdwg.mxu0
      %v1053 = vmul.f32 %v1048, 0.25
      %v1054 = vadd.f32 %v1053, %v887
      %v1055 = vsel %vm941, %v1054, -inf
      %1056 = vmax.xlane.f32.xlu0 %v1055
      %v1057 = vpop.xlane.xlu0 %1056
      %v1058 = vsub.f32 %v1054, %v1057
      %v1059 = vmul.f32 %v1058, 1.442695
      %v1060 = vpow.pop %v1059
      %v1061 = vsel %vm941, %v1060, 0.0
      %1062 = vadd.xlane.f32.xlu0 %v1061
      %v1063 = vpop.xlane.xlu0 %1062
      %v1064 = vrcp.pop %v1063
      %v1065 = vmul.f32 %v1060, %v1064
      %v1066 = vpack.c.bf16 %v1065, %v1065
      %1067 = vrot.lane.b32.xlu0 %v888, 48
      %v1068 = vpop.permute.xlu0 %1067
      %v1070 = vsel %vm941, %v1066, 0
      %v1073 = vsel %vm959, %v1068, 0
      %1075 = vmatprep.subr.bf16.mxu0 0
      %1076 = vmatpush1.bf16.msra.mxu0 0
      %1077 = vmatprep.subr.bf16.mxu0 0
      %1078 = vmatpush1.bf16.msra.mxu0 0
      %1079 = vmatprep.subr.bf16.mxu0 0
      %1080 = vmatpush1.bf16.msra.mxu0 0
      %1081 = vmatprep.subr.bf16.mxu0 0
      %1082 = vmatpush1.bf16.msra.mxu0 0
      %1083 = vmatprep.subr.bf16.mxu0 0
      %1084 = vmatpush1.bf16.msra.mxu0 0
      %1085 = vmatprep.subr.bf16.mxu0 0
      %1086 = vmatpush1.bf16.msra.mxu0 0
      %1087 = vmatprep.subr.bf16.mxu0 0
      %1088 = vmatpush1.bf16.msra.mxu0 0
      %1089 = vmatprep.subr.bf16.mxu0 0
      %1090 = vmatpush1.bf16.msra.mxu0 %v1073
      %1091 = vmatprep.subr.bf16.mxu0 0
      %1092 = vmatpush2.bf16.msra.mxu0 0
      %1093 = vmatprep.subr.bf16.mxu0 0
      %1094 = vmatpush2.bf16.msra.mxu0 0
      %1095 = vmatprep.subr.bf16.mxu0 0
      %1096 = vmatpush2.bf16.msra.mxu0 0
      %1097 = vmatprep.subr.bf16.mxu0 0
      %1098 = vmatpush2.bf16.msra.mxu0 0
      %1099 = vmatprep.subr.bf16.mxu0 0
      %1100 = vmatpush2.bf16.msra.mxu0 0
      %1101 = vmatprep.subr.bf16.mxu0 0
      %1102 = vmatpush2.bf16.msra.mxu0 0
      %1103 = vmatprep.subr.bf16.mxu0 0
      %1104 = vmatpush2.bf16.msra.mxu0 0
      %1105 = vmatprep.subr.bf16.mxu0 0
      %1106 = vmatpush2.bf16.msra.mxu0 0
      %1107 = vmatprep.mubr.bf16.mxu0 0
      %1108 = vmatmul.mubr.bf16.gmra.mxu0 %v1070
      %v1109 = vpop.f32.mrf.mxu0
      %v1110 = vadd.f32 0.0, %v1109
      %v1111 = vpop.f32.mrf.mxu0
      %v1112 = vpop.f32.mrf.mxu0
      %v1113 = vpop.f32.mrf.mxu0
      %1114 = vdwg.mxu0
      %1116 = vrot.lane.b32.xlu0 %v1110, 16
      %v1117 = vpop.permute.xlu0 %1116
      %v1119 = vsel %vm892, %v998, %v1117
      %v1120 = vpack.c.bf16 %v1119, %v1119
      %v1121 = vld [vmem:[%s738] sm:$0xf]
      %v1122 = vld [vmem:[%s738 + $0x4] sm:$0xf]
      %v1123 = vld [vmem:[%s738 + $0x8] sm:$0xf]
      %v1124 = vld [vmem:[%s738 + $0xc] sm:$0xf]
      %v1125 = vld [vmem:[%s741] sm:$0x1]
      %v1127 = vlaneseq
      %v1128 = vshrl.u32 %v1127, 7
      %v1129 = vsub.s32 0, %v1128
      %v1130 = vrot.slane %v1125, %v1129
      %v1136 = vunpack.c.l.b16 %v1121
      %v1137 = vunpack.c.l.b16 %v1122
      %v1138 = vunpack.c.l.b16 %v1123
      %v1139 = vunpack.c.l.b16 %v1124
      %v1140 = vpack.c.b16 %v1137, %v1136
      %v1141 = vpack.c.b16 %v1139, %v1138
      %v1145 = vsel %vm776, %v1120, 0
      %1147 = vmatprep.subr.bf16.mxu0 0
      %1148 = vmatpush1.bf16.msra.mxu0 0
      %1149 = vmatprep.subr.bf16.mxu0 0
      %1150 = vmatpush1.bf16.msra.mxu0 0
      %1151 = vmatprep.subr.bf16.mxu0 0
      %1152 = vmatpush1.bf16.msra.mxu0 0
      %1153 = vmatprep.subr.bf16.mxu0 0
      %1154 = vmatpush1.bf16.msra.mxu0 0
      %1155 = vmatprep.subr.bf16.mxu0 0
      %1156 = vmatpush1.bf16.msra.mxu0 0
      %1157 = vmatprep.subr.bf16.mxu0 0
      %1158 = vmatpush1.bf16.msra.mxu0 0
      %1159 = vmatprep.subr.bf16.mxu0 0
      %1160 = vmatpush1.bf16.msra.mxu0 %v1141
      %1161 = vmatprep.subr.bf16.mxu0 0
      %1162 = vmatpush1.bf16.msra.mxu0 %v1140
      %1163 = vmatprep.subr.bf16.mxu0 0
      %1164 = vmatpush2.bf16.msra.mxu0 0
      %1165 = vmatprep.subr.bf16.mxu0 0
      %1166 = vmatpush2.bf16.msra.mxu0 0
      %1167 = vmatprep.subr.bf16.mxu0 0
      %1168 = vmatpush2.bf16.msra.mxu0 0
      %1169 = vmatprep.subr.bf16.mxu0 0
      %1170 = vmatpush2.bf16.msra.mxu0 0
      %1171 = vmatprep.subr.bf16.mxu0 0
      %1172 = vmatpush2.bf16.msra.mxu0 0
      %1173 = vmatprep.subr.bf16.mxu0 0
      %1174 = vmatpush2.bf16.msra.mxu0 0
      %1175 = vmatprep.subr.bf16.mxu0 0
      %1176 = vmatpush2.bf16.msra.mxu0 0
      %1177 = vmatprep.subr.bf16.mxu0 0
      %1178 = vmatpush2.bf16.msra.mxu0 0
      %1179 = vmatprep.mubr.bf16.mxu0 0
      %1180 = vmatmul.mubr.bf16.gmra.mxu0 %v1145
      %v1181 = vpop.f32.mrf.mxu0
      %v1182 = vadd.f32 %v1130, %v1181
      %v1183 = vpop.f32.mrf.mxu0
      %v1184 = vpop.f32.mrf.mxu0
      %v1185 = vpop.f32.mrf.mxu0
      %1186 = vdwg.mxu0
      %v1187 = vadd.f32 %v775, %v1182
      %v1188 = vsel %vm776, %v1187, 0.0
      %1189 = vadd.xlane.f32.xlu0 %v1188
      %v1190 = vpop.xlane.xlu0 %1189
      %v1191 = vmul.f32 %v1190, %v780
      %v1192 = vsub.f32 %v1187, %v1191
      %v1193 = vmul.f32 %v1192, %v1192
      %v1194 = vsel %vm776, %v1193, 0.0
      %1195 = vadd.xlane.f32.xlu0 %v1194
      %v1196 = vpop.xlane.xlu0 %1195
      %v1197 = vmul.f32 %v1196, %v780
      %v1198 = vadd.f32 %v1197, 1e-05
      %v1199 = vrsqrt.pop %v1198
      %v1200 = vmul.f32 %v1192, %v1199
      %v1201 = vld [vmem:[%s744] sm:$0x1]
      %v1203 = vlaneseq
      %v1204 = vshrl.u32 %v1203, 7
      %v1205 = vsub.s32 0, %v1204
      %v1206 = vrot.slane %v1201, %v1205
      %v1208 = vmul.f32 %v1200, %v1206
      %v1209 = vld [vmem:[%s747] sm:$0x1]
      %v1211 = vlaneseq
      %v1212 = vshrl.u32 %v1211, 7
      %v1213 = vsub.s32 0, %v1212
      %v1214 = vrot.slane %v1209, %v1213
      %v1216 = vadd.f32 %v1208, %v1214
      %v1217 = vpack.c.bf16 %v1216, %v1216
      %v1218 = vld [vmem:[%s752] sm:$0xf]
      %v1219 = vld [vmem:[%s752 + $0x4] sm:$0xf]
      %v1220 = vld [vmem:[%s752 + $0x8] sm:$0xf]
      %v1221 = vld [vmem:[%s752 + $0xc] sm:$0xf]
      %v1222 = vld [vmem:[%s755] sm:$0x1]
      %v1224 = vlaneseq
      %v1225 = vshrl.u32 %v1224, 7
      %v1226 = vsub.s32 0, %v1225
      %v1227 = vrot.slane %v1222, %v1226
      %v1233 = vunpack.c.l.b16 %v1218
      %v1234 = vunpack.c.l.b16 %v1219
      %v1235 = vunpack.c.l.b16 %v1220
      %v1236 = vunpack.c.l.b16 %v1221
      %v1237 = vpack.c.b16 %v1234, %v1233
      %v1238 = vpack.c.b16 %v1236, %v1235
      %v1242 = vsel %vm776, %v1217, 0
      %1244 = vmatprep.subr.bf16.mxu0 0
      %1245 = vmatpush1.bf16.msra.mxu0 0
      %1246 = vmatprep.subr.bf16.mxu0 0
      %1247 = vmatpush1.bf16.msra.mxu0 0
      %1248 = vmatprep.subr.bf16.mxu0 0
      %1249 = vmatpush1.bf16.msra.mxu0 0
      %1250 = vmatprep.subr.bf16.mxu0 0
      %1251 = vmatpush1.bf16.msra.mxu0 0
      %1252 = vmatprep.subr.bf16.mxu0 0
      %1253 = vmatpush1.bf16.msra.mxu0 0
      %1254 = vmatprep.subr.bf16.mxu0 0
      %1255 = vmatpush1.bf16.msra.mxu0 0
      %1256 = vmatprep.subr.bf16.mxu0 0
      %1257 = vmatpush1.bf16.msra.mxu0 %v1238
      %1258 = vmatprep.subr.bf16.mxu0 0
      %1259 = vmatpush1.bf16.msra.mxu0 %v1237
      %1260 = vmatprep.subr.bf16.mxu0 0
      %1261 = vmatpush2.bf16.msra.mxu0 0
      %1262 = vmatprep.subr.bf16.mxu0 0
      %1263 = vmatpush2.bf16.msra.mxu0 0
      %1264 = vmatprep.subr.bf16.mxu0 0
      %1265 = vmatpush2.bf16.msra.mxu0 0
      %1266 = vmatprep.subr.bf16.mxu0 0
      %1267 = vmatpush2.bf16.msra.mxu0 0
      %1268 = vmatprep.subr.bf16.mxu0 0
      %1269 = vmatpush2.bf16.msra.mxu0 0
      %1270 = vmatprep.subr.bf16.mxu0 0
      %1271 = vmatpush2.bf16.msra.mxu0 0
      %1272 = vmatprep.subr.bf16.mxu0 0
      %1273 = vmatpush2.bf16.msra.mxu0 0
      %1274 = vmatprep.subr.bf16.mxu0 0
      %1275 = vmatpush2.bf16.msra.mxu0 0
      %1276 = vmatprep.mubr.bf16.mxu0 0
      %1277 = vmatmul.mubr.bf16.gmra.mxu0 %v1242
      %v1278 = vpop.f32.mrf.mxu0
      %v1279 = vadd.f32 %v1227, %v1278
      %v1280 = vpop.f32.mrf.mxu0
      %v1281 = vpop.f32.mrf.mxu0
      %v1282 = vpop.f32.mrf.mxu0
      %1283 = vdwg.mxu0
      %v1284 = vmul.f32 %v1279, 0.5
      %v1285 = vmul.f32 %v1279, 0.044715
      %v1286 = vmul.f32 %v1285, %v1279
      %v1287 = vmul.f32 %v1286, %v1279
      %v1288 = vadd.f32 %v1279, %v1287
      %v1289 = vmul.f32 %v1288, 0.7978846
      %v1290 = vtanh.pop %v1289
      %v1291 = vadd.f32 %v1290, 1.0
      %v1292 = vmul.f32 %v1284, %v1291
      %v1293 = vpack.c.bf16 %v1292, %v1292
      %v1294 = vld [vmem:[%s760] sm:$0xf]
      %v1295 = vld [vmem:[%s760 + $0x4] sm:$0xf]
      %v1296 = vld [vmem:[%s760 + $0x8] sm:$0xf]
      %v1297 = vld [vmem:[%s760 + $0xc] sm:$0xf]
      %v1298 = vld [vmem:[%s760 + $0x10] sm:$0xf]
      %v1299 = vld [vmem:[%s760 + $0x14] sm:$0xf]
      %v1300 = vld [vmem:[%s760 + $0x18] sm:$0xf]
      %v1301 = vld [vmem:[%s760 + $0x1c] sm:$0xf]
      %v1302 = vld [vmem:[%s760 + $0x20] sm:$0xf]
      %v1303 = vld [vmem:[%s760 + $0x24] sm:$0xf]
      %v1304 = vld [vmem:[%s760 + $0x28] sm:$0xf]
      %v1305 = vld [vmem:[%s760 + $0x2c] sm:$0xf]
      %v1306 = vld [vmem:[%s760 + $0x30] sm:$0xf]
      %v1307 = vld [vmem:[%s760 + $0x34] sm:$0xf]
      %v1308 = vld [vmem:[%s760 + $0x38] sm:$0xf]
      %v1309 = vld [vmem:[%s760 + $0x3c] sm:$0xf]
      %v1310 = vld [vmem:[%s763] sm:$0x1]
      %v1312 = vlaneseq
      %v1313 = vshrl.u32 %v1312, 7
      %v1314 = vsub.s32 0, %v1313
      %v1315 = vrot.slane %v1310, %v1314
      %v1333 = vunpack.c.l.b16 %v1294
      %v1334 = vunpack.c.l.b16 %v1295
      %v1335 = vunpack.c.l.b16 %v1296
      %v1336 = vunpack.c.l.b16 %v1297
      %v1337 = vunpack.c.l.b16 %v1298
      %v1338 = vunpack.c.l.b16 %v1299
      %v1339 = vunpack.c.l.b16 %v1300
      %v1340 = vunpack.c.l.b16 %v1301
      %v1341 = vunpack.c.l.b16 %v1302
      %v1342 = vunpack.c.l.b16 %v1303
      %v1343 = vunpack.c.l.b16 %v1304
      %v1344 = vunpack.c.l.b16 %v1305
      %v1345 = vunpack.c.l.b16 %v1306
      %v1346 = vunpack.c.l.b16 %v1307
      %v1347 = vunpack.c.l.b16 %v1308
      %v1348 = vunpack.c.l.b16 %v1309
      %v1349 = vpack.c.b16 %v1334, %v1333
      %v1350 = vpack.c.b16 %v1336, %v1335
      %v1351 = vpack.c.b16 %v1338, %v1337
      %v1352 = vpack.c.b16 %v1340, %v1339
      %v1353 = vpack.c.b16 %v1342, %v1341
      %v1354 = vpack.c.b16 %v1344, %v1343
      %v1355 = vpack.c.b16 %v1346, %v1345
      %v1356 = vpack.c.b16 %v1348, %v1347
      %1365 = vmatprep.subr.bf16.mxu0 0
      %1366 = vmatpush1.bf16.msra.mxu0 %v1356
      %1367 = vmatprep.subr.bf16.mxu0 0
      %1368 = vmatpush1.bf16.msra.mxu0 %v1355
      %1369 = vmatprep.subr.bf16.mxu0 0
      %1370 = vmatpush1.bf16.msra.mxu0 %v1354
      %1371 = vmatprep.subr.bf16.mxu0 0
      %1372 = vmatpush1.bf16.msra.mxu0 %v1353
      %1373 = vmatprep.subr.bf16.mxu0 0
      %1374 = vmatpush1.bf16.msra.mxu0 %v1352
      %1375 = vmatprep.subr.bf16.mxu0 0
      %1376 = vmatpush1.bf16.msra.mxu0 %v1351
      %1377 = vmatprep.subr.bf16.mxu0 0
      %1378 = vmatpush1.bf16.msra.mxu0 %v1350
      %1379 = vmatprep.subr.bf16.mxu0 0
      %1380 = vmatpush1.bf16.msra.mxu0 %v1349
      %1381 = vmatprep.subr.bf16.mxu0 0
      %1382 = vmatpush2.bf16.msra.mxu0 0
      %1383 = vmatprep.subr.bf16.mxu0 0
      %1384 = vmatpush2.bf16.msra.mxu0 0
      %1385 = vmatprep.subr.bf16.mxu0 0
      %1386 = vmatpush2.bf16.msra.mxu0 0
      %1387 = vmatprep.subr.bf16.mxu0 0
      %1388 = vmatpush2.bf16.msra.mxu0 0
      %1389 = vmatprep.subr.bf16.mxu0 0
      %1390 = vmatpush2.bf16.msra.mxu0 0
      %1391 = vmatprep.subr.bf16.mxu0 0
      %1392 = vmatpush2.bf16.msra.mxu0 0
      %1393 = vmatprep.subr.bf16.mxu0 0
      %1394 = vmatpush2.bf16.msra.mxu0 0
      %1395 = vmatprep.subr.bf16.mxu0 0
      %1396 = vmatpush2.bf16.msra.mxu0 0
      %1397 = vmatprep.mubr.bf16.mxu0 0
      %1398 = vmatmul.mubr.bf16.gmra.mxu0 %v1293
      %v1399 = vpop.f32.mrf.mxu0
      %v1400 = vadd.f32 %v1315, %v1399
      %v1401 = vpop.f32.mrf.mxu0
      %v1402 = vpop.f32.mrf.mxu0
      %v1403 = vpop.f32.mrf.mxu0
      %1404 = vdwg.mxu0
      %v1405 = vadd.f32 %v1187, %v1400
      %1406 = vst.msk [vmem:[#allocation2] sm:$0xff] %vm776, %v1405
      %p1407 = scmp.eq.s32.totalorder %s40, 1
      // Predicated region
      $region93: #{gpt2_merged_forward.1} parent=87 // pred_check
        %p1408 = pneg %p1407
      $region94: #{gpt2_merged_forward.1} parent=87 // pred_check_branch
        %1410 = sbr.rel (%p1408) target = $region96
      $region95: #{gpt2_merged_forward.1} parent=87 // pred_region
        %s1411 = sld [smem:[#allocation4 + %s39]]
        %v1412 = vstv %s1411
        %vm1413 = vcmp.eq.s32.totalorder %v875, %v1412
        %v1414 = vsel %vm1413, 1, 0
        %v1415 = vcvt.s32.f32 %v1414
        %v1416 = vmul.f32 %v1405, %v1415
        %v1417 = vsel %vm776, %v1416, 0.0
        %v1418 = vrot.slane %v1417, 4
        %v1419 = vadd.f32 %v1417, %v1418
        %v1420 = vrot.slane %v1419, 2
        %v1421 = vadd.f32 %v1419, %v1420
        %v1422 = vrot.slane %v1421, 1
        %v1423 = vadd.f32 %v1421, %v1422
        %v1424 = vsel %vm776, %v1423, 0.0
        %1425 = vadd.xlane.f32.xlu0 %v1424
        %v1426 = vpop.xlane.xlu0 %1425
        %v1427 = vmul.f32 %v1426, %v780
        %v1428 = vsub.f32 %v1423, %v1427
        %v1429 = vmul.f32 %v1428, %v1428
        %v1430 = vsel %vm776, %v1429, 0.0
        %1431 = vadd.xlane.f32.xlu0 %v1430
        %v1432 = vpop.xlane.xlu0 %1431
        %v1433 = vmul.f32 %v1432, %v780
        %v1434 = vadd.f32 %v1433, 1e-05
        %v1435 = vrsqrt.pop %v1434
        %v1436 = vmul.f32 %v1428, %v1435
        %v1437 = vld [vmem:[%s15] sm:$0x1]
        %v1438 = vmul.f32 %v1436, %v1437
        %v1439 = vld [vmem:[%s16] sm:$0x1]
        %v1440 = vadd.f32 %v1438, %v1439
        %v1441 = vpack.c.bf16 %v1440, %v1440
        %v1442 = vld [vmem:[%s17] sm:$0xf]
        %v1443 = vld [vmem:[%s17 + $0x4] sm:$0xf]
        %v1444 = vld [vmem:[%s17 + $0x8] sm:$0xf]
        %v1445 = vld [vmem:[%s17 + $0xc] sm:$0xf]
        %v1450 = vunpack.c.l.b16 %v1442
        %v1451 = vunpack.c.l.b16 %v1443
        %v1452 = vunpack.c.l.b16 %v1444
        %v1453 = vunpack.c.l.b16 %v1445
        %v1454 = vpack.c.b16 %v1451, %v1450
        %v1455 = vpack.c.b16 %v1453, %v1452
        %v1459 = vsel %vm776, %v1441, 0
        %1461 = vmatprep.subr.bf16.mxu0 0
        %1462 = vmatpush1.bf16.msra.mxu0 0
        %1463 = vmatprep.subr.bf16.mxu0 0
        %1464 = vmatpush1.bf16.msra.mxu0 0
        %1465 = vmatprep.subr.bf16.mxu0 0
        %1466 = vmatpush1.bf16.msra.mxu0 0
        %1467 = vmatprep.subr.bf16.mxu0 0
        %1468 = vmatpush1.bf16.msra.mxu0 0
        %1469 = vmatprep.subr.bf16.mxu0 0
        %1470 = vmatpush1.bf16.msra.mxu0 0
        %1471 = vmatprep.subr.bf16.mxu0 0
        %1472 = vmatpush1.bf16.msra.mxu0 0
        %1473 = vmatprep.subr.bf16.mxu0 0
        %1474 = vmatpush1.bf16.msra.mxu0 %v1455
        %1475 = vmatprep.subr.bf16.mxu0 0
        %1476 = vmatpush1.bf16.msra.mxu0 %v1454
        %1477 = vmatprep.subr.bf16.mxu0 0
        %1478 = vmatpush2.bf16.msra.mxu0 0
        %1479 = vmatprep.subr.bf16.mxu0 0
        %1480 = vmatpush2.bf16.msra.mxu0 0
        %1481 = vmatprep.subr.bf16.mxu0 0
        %1482 = vmatpush2.bf16.msra.mxu0 0
        %1483 = vmatprep.subr.bf16.mxu0 0
        %1484 = vmatpush2.bf16.msra.mxu0 0
        %1485 = vmatprep.subr.bf16.mxu0 0
        %1486 = vmatpush2.bf16.msra.mxu0 0
        %1487 = vmatprep.subr.bf16.mxu0 0
        %1488 = vmatpush2.bf16.msra.mxu0 0
        %1489 = vmatprep.subr.bf16.mxu0 0
        %1490 = vmatpush2.bf16.msra.mxu0 0
        %1491 = vmatprep.subr.bf16.mxu0 0
        %1492 = vmatpush2.bf16.msra.mxu0 0
        %1493 = vmatprep.mubr.bf16.mxu0 0
        %1494 = vmatmul.mubr.bf16.gmra.mxu0 %v1459
        %v1495 = vpop.f32.mrf.mxu0
        %v1496 = vadd.f32 0.0, %v1495
        %v1497 = vpop.f32.mrf.mxu0
        %v1498 = vpop.f32.mrf.mxu0
        %v1499 = vpop.f32.mrf.mxu0
        %1500 = vdwg.mxu0
        %vm1501 = vcmask 40960
        %1502 = vst.msk [vmem:[%s766] sm:$0x1] %vm1501, %v1496
      $region96: #{gpt2_merged_forward.1} parent=87 // pred_fallthru
        _
      %p1503 = scmp.lt.s32.totalorder %s39, 1
      %s1504 = scalar_select %p1503, %s39, 1
      %s1505 = scalar_lea.vmem %s18, %s1504
      // Predicated region
      $region97: #{gpt2_merged_forward.1} parent=87 // pred_check
        %p1506 = pneg %p492
      $region98: #{gpt2_merged_forward.1} parent=87 // pred_check_branch
        %1508 = sbr.rel (%p1506) target = $region100
      $region99: #{gpt2_merged_forward.1} parent=87 // pred_region
        _
      $region100: #{gpt2_merged_forward.1} parent=87 // pred_fallthru
        _
    $region88: #{gpt2_merged_forward.1} parent=5 // pred_fallthru
      _
    %p1509 = scmp.le.s32.totalorder 2, %s30
    // Predicated region
    $region101: #{gpt2_merged_forward.1} parent=5 // pred_check
      %p1510 = pneg %p1509
    $region102: #{gpt2_merged_forward.1} parent=5 // pred_check_branch
      %1512 = sbr.rel (%p1510) target = $region104
    $region103: #{gpt2_merged_forward.1} parent=5 // pred_region
      %s1513 = ssub.s32 %s30, 2
      // Predicated region
      $region105: #{gpt2_merged_forward.1} parent=103 // pred_check
        %p1514 = pneg %p498
      $region106: #{gpt2_merged_forward.1} parent=103 // pred_check_branch
        %1516 = sbr.rel (%p1514) target = $region108
      $region107: #{gpt2_merged_forward.1} parent=103 // pred_region
        %p1517 = scmp.lt.s32.totalorder %s41, 1
        %s1518 = scalar_select %p1517, %s41, 1
        %s1519 = scalar_lea.vmem %s18, %s1518
      $region108: #{gpt2_merged_forward.1} parent=103 // pred_fallthru
        _
    $region104: #{gpt2_merged_forward.1} parent=5 // pred_fallthru
      _
  $region6: #{gpt2_merged_forward.1} parent=0 // loop_footer
    %s34 = sadd.s32 1, %s30
  $region7: #{gpt2_merged_forward.1} parent=0 // loop_footer_branch
    %29 = sbr.rel target = $region3
  $region8: #{gpt2_merged_forward.1} parent=0 // loop_exit
    _

</llo_original>
